<compile_context>
chip_gen: v6e
topology: v6e:2x2x1
jax: 0.10.0
libtpu: 0.0.40
codegen_flags: <defaults>
</compile_context>

<pallas_src>
import jax
import jax.numpy as jnp
from jax.experimental import pallas as pl
from jax.experimental.pallas import tpu as pltpu


def _round_up(x, m):
    return (x + m - 1) // m * m


# ---------------------------------------------------------------------------
# Pallas kernel: full network for one batch tile of NB images.
# ---------------------------------------------------------------------------
def classifier_kernel(x_ref, w1_ref, b1_ref, w2_ref, b2_ref,
                      wf1_ref, bf1_ref, wf2_ref, bf2_ref, o_ref):
    F1 = b1_ref.shape[1]                       # C1 * (H/2) * (W/2)   (=256)
    F2 = b2_ref.shape[1]                       # C2 * (H/4) * (W/4)   (=128)

    x = x_ref[...]                             # (NB, Cin*H*W) bf16

    # conv1 + maxpool folded into one matmul: the 4 pool candidates occupy
    # contiguous, 128-aligned column groups; reduce them with a 4-way max.
    s1 = jnp.dot(x, w1_ref[...], preferred_element_type=jnp.float32)
    m1 = jnp.maximum(jnp.maximum(s1[:, 0 * F1:1 * F1], s1[:, 1 * F1:2 * F1]),
                     jnp.maximum(s1[:, 2 * F1:3 * F1], s1[:, 3 * F1:4 * F1]))
    h1 = jnp.maximum(m1 + b1_ref[...], 0.0).astype(jnp.bfloat16)   # (NB, F1)

    # conv2 + maxpool, same trick.
    s2 = jnp.dot(h1, w2_ref[...], preferred_element_type=jnp.float32)
    m2 = jnp.maximum(jnp.maximum(s2[:, 0 * F2:1 * F2], s2[:, 1 * F2:2 * F2]),
                     jnp.maximum(s2[:, 2 * F2:3 * F2], s2[:, 3 * F2:4 * F2]))
    h2 = jnp.maximum(m2 + b2_ref[...], 0.0).astype(jnp.bfloat16)   # (NB, 128)

    # fc1 + ReLU (h2 layout already matches torch's NCHW flatten).
    h3 = jnp.dot(h2, wf1_ref[...], preferred_element_type=jnp.float32)
    h3 = jnp.maximum(h3 + bf1_ref[...], 0.0).astype(jnp.bfloat16)  # (NB, 128)

    # fc2, padded to 128 output lanes -> unmasked lane-dense store.
    y = jnp.dot(h3, wf2_ref[...], preferred_element_type=jnp.float32)
    o_ref[...] = y + bf2_ref[...]


# ---------------------------------------------------------------------------
# Host-side weight preprocessing (done once; all static shapes)
# ---------------------------------------------------------------------------
def _conv_as_dense(w_oihw, Cin, H, W):
    """Dense (Cin*H*W, Cout*H*W) matrix equal to 3x3 pad-1 conv on a fixed
    HxW grid; both sides flattened channel-major (c, h, w)."""
    eye = jnp.eye(Cin * H * W, dtype=jnp.float32).reshape(-1, Cin, H, W)
    y = jax.lax.conv_general_dilated(
        eye, w_oihw.astype(jnp.float32), (1, 1), ((1, 1), (1, 1)),
        dimension_numbers=("NCHW", "OIHW", "NCHW"))
    return y.reshape(Cin * H * W, -1)


def _fold_pool(dense, Cout, H, W):
    """Concatenate the four maxpool(2,2) candidate column subsets.

    Returns (K, 4*Cout*(H//2)*(W//2)); candidate (a, b) occupies column group
    a*2 + b, each group laid out channel-major (co, p, q)."""
    K = dense.shape[0]
    d = dense.reshape(K, Cout, H, W)
    groups = [d[:, :, a::2, b::2].reshape(K, -1)
              for a in range(2) for b in range(2)]
    return jnp.concatenate(groups, axis=1)


def prepare_params(params, channel, num_classes, H=8, W=8):
    cw1, cb1, cw2, cb2, fw1, fb1, fw2, fb2 = params
    C1, C2 = int(cw1.shape[0]), int(cw2.shape[0])
    H2, W2 = H // 2, W // 2
    Hp, Wp = H2 // 2, W2 // 2
    assert C2 * Hp * Wp == fw1.shape[1], \
        "module requires 8x8 spatial input (fc1 expects 128 features)"
    nc_pad = _round_up(num_classes, 128)

    w1 = _fold_pool(_conv_as_dense(cw1, channel, H, W), C1, H, W)
    w2 = _fold_pool(_conv_as_dense(cw2, C1, H2, W2), C2, H2, W2)

    return dict(
        w1=w1.astype(jnp.bfloat16),                                  # (Cin*64, 4*256)
        b1=jnp.repeat(cb1, H2 * W2).reshape(1, -1).astype(jnp.float32),
        w2=w2.astype(jnp.bfloat16),                                  # (256, 4*128)
        b2=jnp.repeat(cb2, Hp * Wp).reshape(1, -1).astype(jnp.float32),
        wf1=fw1.T.astype(jnp.bfloat16),                              # (128, 128)
        bf1=fb1.reshape(1, -1).astype(jnp.float32),
        wf2=jnp.pad(fw2.T, ((0, 0), (0, nc_pad - num_classes))).astype(jnp.bfloat16),
        bf2=jnp.pad(fb2, (0, nc_pad - num_classes)).reshape(1, -1).astype(jnp.float32),
    )


# ---------------------------------------------------------------------------
# Forward pass
# ---------------------------------------------------------------------------
def _choose_batch_tile(N):
    """M of all matmuls.  <=256 (fills the 256-wide MXU on v6e/v7x), multiple
    of 8; for large N keep an even tile count so v7x's two TCs stay busy."""
    if N <= 256:
        return _round_up(N, 8)
    n_tiles = -(-N // 256)
    if n_tiles % 2:
        n_tiles += 1
    return _round_up(-(-N // n_tiles), 8)


def classifier_forward(x_nchw, prepped, num_classes):
    N, Cin, H, W = (int(d) for d in x_nchw.shape)
    K1 = Cin * H * W
    F1 = prepped["b1"].shape[1]
    F2 = prepped["b2"].shape[1]
    NH = prepped["bf1"].shape[1]
    NCp = prepped["bf2"].shape[1]

    NB = _choose_batch_tile(N)
    Npad = _round_up(N, NB)
    grid = (Npad // NB,)

    # NCHW flatten is already channel-major -> just a reshape (no transpose);
    # bf16 cast + batch pad fuse into one cheap pass under jit.
    x2d = x_nchw.reshape(N, K1).astype(jnp.bfloat16)
    if Npad != N:
        x2d = jnp.pad(x2d, ((0, Npad - N), (0, 0)))

    flops = 2 * Npad * (K1 * 4 * F1 + F1 * 4 * F2 + F2 * NH + NH * NCp)
    bytes_accessed = (Npad * K1 * 2 + Npad * NCp * 4
                      + prepped["w1"].size * 2 + prepped["w2"].size * 2
                      + prepped["wf1"].size * 2 + prepped["wf2"].size * 2
                      + (F1 + F2 + NH + NCp) * 4)

    out = pl.pallas_call(
        classifier_kernel,
        out_shape=jax.ShapeDtypeStruct((Npad, NCp), jnp.float32),
        grid=grid,
        in_specs=[
            pl.BlockSpec((NB, K1), lambda i: (i, 0)),
            pl.BlockSpec(prepped["w1"].shape, lambda i: (0, 0)),
            pl.BlockSpec((1, F1), lambda i: (0, 0)),
            pl.BlockSpec(prepped["w2"].shape, lambda i: (0, 0)),
            pl.BlockSpec((1, F2), lambda i: (0, 0)),
            pl.BlockSpec(prepped["wf1"].shape, lambda i: (0, 0)),
            pl.BlockSpec((1, NH), lambda i: (0, 0)),
            pl.BlockSpec(prepped["wf2"].shape, lambda i: (0, 0)),
            pl.BlockSpec((1, NCp), lambda i: (0, 0)),
        ],
        out_specs=pl.BlockSpec((NB, NCp), lambda i: (i, 0)),
        compiler_params=pltpu.CompilerParams(
            dimension_semantics=("parallel",),
            vmem_limit_bytes=32 * 1024 * 1024),
        cost_estimate=pl.CostEstimate(flops=flops, transcendentals=0,
                                      bytes_accessed=bytes_accessed),
    )(x2d, prepped["w1"], prepped["b1"], prepped["w2"], prepped["b2"],
      prepped["wf1"], prepped["bf1"], prepped["wf2"], prepped["bf2"])

    return out[:N, :num_classes]


# ---------------------------------------------------------------------------
# Pure-JAX f32 reference (correctness check only)
# ---------------------------------------------------------------------------
def reference_forward(x, params):
    (cw1, cb1, cw2, cb2, fw1, fb1, fw2, fb2) = params

    def conv(y, w, b):
        y = jax.lax.conv_general_dilated(
            y, w, (1, 1), ((1, 1), (1, 1)),
            dimension_numbers=("NCHW", "OIHW", "NCHW"))
        return jax.nn.relu(y + b[None, :, None, None])

    def pool(y):
        return jax.lax.reduce_window(y, -jnp.inf, jax.lax.max,
                                     (1, 1, 2, 2), (1, 1, 2, 2), "VALID")

    y = pool(conv(x, cw1, cb1))
    y = pool(conv(y, cw2, cb2))
    y = y.reshape(y.shape[0], -1)
    y = jax.nn.relu(y @ fw1.T + fb1)
    return y @ fw2.T + fb2


# ---------------------------------------------------------------------------
# Deterministic parameter init + demo
# ---------------------------------------------------------------------------
def init_params(key, channel, num_classes):
    ks = jax.random.split(key, 8)
    s = 0.1
    cw1 = jax.random.normal(ks[0], (16, channel, 3, 3), jnp.float32) * s
    cb1 = jax.random.normal(ks[1], (16,), jnp.float32) * s
    cw2 = jax.random.normal(ks[2], (32, 16, 3, 3), jnp.float32) * s
    cb2 = jax.random.normal(ks[3], (32,), jnp.float32) * s
    fw1 = jax.random.normal(ks[4], (128, 128), jnp.float32) * s
    fb1 = jax.random.normal(ks[5], (128,), jnp.float32) * s
    fw2 = jax.random.normal(ks[6], (num_classes, 128), jnp.float32) * s
    fb2 = jax.random.normal(ks[7], (num_classes,), jnp.float32) * s
    return (cw1, cb1, cw2, cb2, fw1, fb1, fw2, fb2)


if __name__ == "__main__":
    num_classes = 10
    channel = 4
    # Spatial must be 8x8 so two 2x2 pools give 2x2 and 32*2*2 == 128,
    # matching the module's fc1 = nn.Linear(128, 128).
    batch, H, W = 2, 8, 8

    key = jax.random.PRNGKey(0)
    k_x, k_p = jax.random.split(key)
    x = jax.random.normal(k_x, (batch, channel, H, W), jnp.float32)
    params = init_params(k_p, channel, num_classes)
    prepped = prepare_params(params, channel, num_classes, H, W)

    fwd = jax.jit(classifier_forward, static_argnames=("num_classes",))
    out = jax.block_until_ready(fwd(x, prepped, num_classes=num_classes))

    ref = reference_forward(x, params)
    assert out.shape == (batch, num_classes), out.shape
    err = float(jnp.max(jnp.abs(out - ref)))
    # bf16 weights/activations with f32 accumulation -> loose-ish tolerance.
    assert err < 5e-2, ("mismatch vs reference", err)
    print("KERNEL_OK")
</pallas_src>

<mosaic_0001>
module attributes {stable_mosaic.version = 11 : i64} {
  func.func @classifier_kernel(%arg0: i32, %arg1: memref<8x256xbf16, #tpu.memory_space<vmem>>, %arg2: memref<256x1024xbf16, #tpu.memory_space<vmem>>, %arg3: memref<1x256xf32, #tpu.memory_space<vmem>>, %arg4: memref<256x512xbf16, #tpu.memory_space<vmem>>, %arg5: memref<1x128xf32, #tpu.memory_space<vmem>>, %arg6: memref<128x128xbf16, #tpu.memory_space<vmem>>, %arg7: memref<1x128xf32, #tpu.memory_space<vmem>>, %arg8: memref<128x128xbf16, #tpu.memory_space<vmem>>, %arg9: memref<1x128xf32, #tpu.memory_space<vmem>>, %arg10: memref<8x128xf32, #tpu.memory_space<vmem>>) attributes {dimension_semantics = [#tpu.dimension_semantics<parallel>], iteration_bounds = array<i64: 1>, scalar_prefetch = 0 : i64, scratch_operands = 0 : i64, tpu.core_type = #tpu.core_type<tc>, window_params = [{transform_indices = @transform_0, window_bounds = array<i64: 8, 256>}, {pipeline_mode = #tpu.pipeline_mode<synchronous>, transform_indices = @transform_1, window_bounds = array<i64: 256, 1024>}, {pipeline_mode = #tpu.pipeline_mode<synchronous>, transform_indices = @transform_2, window_bounds = array<i64: 1, 256>}, {pipeline_mode = #tpu.pipeline_mode<synchronous>, transform_indices = @transform_3, window_bounds = array<i64: 256, 512>}, {pipeline_mode = #tpu.pipeline_mode<synchronous>, transform_indices = @transform_4, window_bounds = array<i64: 1, 128>}, {pipeline_mode = #tpu.pipeline_mode<synchronous>, transform_indices = @transform_5, window_bounds = array<i64: 128, 128>}, {pipeline_mode = #tpu.pipeline_mode<synchronous>, transform_indices = @transform_6, window_bounds = array<i64: 1, 128>}, {pipeline_mode = #tpu.pipeline_mode<synchronous>, transform_indices = @transform_7, window_bounds = array<i64: 128, 128>}, {pipeline_mode = #tpu.pipeline_mode<synchronous>, transform_indices = @transform_8, window_bounds = array<i64: 1, 128>}, {transform_indices = @transform_9, window_bounds = array<i64: 8, 128>}]} {
    %c0 = arith.constant 0 : index
    %c0_0 = arith.constant 0 : index
    %0 = vector.load %arg1[%c0, %c0_0] : memref<8x256xbf16, #tpu.memory_space<vmem>>, vector<8x256xbf16>
    %c0_1 = arith.constant 0 : index
    %c0_2 = arith.constant 0 : index
    %1 = vector.load %arg2[%c0_1, %c0_2] : memref<256x1024xbf16, #tpu.memory_space<vmem>>, vector<256x1024xbf16>
    %cst = arith.constant dense<0.000000e+00> : vector<8x1024xf32>
    %2 = tpu.matmul %0, %1, %cst {dimension_numbers = #tpu.dot_dimension_numbers<[1], [0], [0], [1], [0, 0, 1, 1], [], []>} : vector<8x256xbf16>, vector<256x1024xbf16>, vector<8x1024xf32> -> vector<8x1024xf32>
    %3 = vector.extract_strided_slice %2 {offsets = [0, 0], sizes = [8, 256], strides = [1, 1]} : vector<8x1024xf32> to vector<8x256xf32>
    %4 = vector.extract_strided_slice %2 {offsets = [0, 256], sizes = [8, 256], strides = [1, 1]} : vector<8x1024xf32> to vector<8x256xf32>
    %5 = arith.maximumf %3, %4 : vector<8x256xf32>
    %6 = vector.extract_strided_slice %2 {offsets = [0, 512], sizes = [8, 256], strides = [1, 1]} : vector<8x1024xf32> to vector<8x256xf32>
    %7 = vector.extract_strided_slice %2 {offsets = [0, 768], sizes = [8, 256], strides = [1, 1]} : vector<8x1024xf32> to vector<8x256xf32>
    %8 = arith.maximumf %6, %7 : vector<8x256xf32>
    %9 = arith.maximumf %5, %8 : vector<8x256xf32>
    %c0_3 = arith.constant 0 : index
    %c0_4 = arith.constant 0 : index
    %10 = vector.load %arg3[%c0_3, %c0_4] : memref<1x256xf32, #tpu.memory_space<vmem>>, vector<1x256xf32>
    %11 = vector.broadcast %10 : vector<1x256xf32> to vector<8x256xf32>
    %12 = arith.addf %9, %11 : vector<8x256xf32>
    %cst_5 = arith.constant 0.000000e+00 : f32
    %13 = vector.broadcast %cst_5 : f32 to vector<8x256xf32>
    %14 = arith.maximumf %12, %13 : vector<8x256xf32>
    %15 = arith.truncf %14 : vector<8x256xf32> to vector<8x256xbf16>
    %c0_6 = arith.constant 0 : index
    %c0_7 = arith.constant 0 : index
    %16 = vector.load %arg4[%c0_6, %c0_7] : memref<256x512xbf16, #tpu.memory_space<vmem>>, vector<256x512xbf16>
    %cst_8 = arith.constant dense<0.000000e+00> : vector<8x512xf32>
    %17 = tpu.matmul %15, %16, %cst_8 {dimension_numbers = #tpu.dot_dimension_numbers<[1], [0], [0], [1], [0, 0, 1, 1], [], []>} : vector<8x256xbf16>, vector<256x512xbf16>, vector<8x512xf32> -> vector<8x512xf32>
    %18 = vector.extract_strided_slice %17 {offsets = [0, 0], sizes = [8, 128], strides = [1, 1]} : vector<8x512xf32> to vector<8x128xf32>
    %19 = vector.extract_strided_slice %17 {offsets = [0, 128], sizes = [8, 128], strides = [1, 1]} : vector<8x512xf32> to vector<8x128xf32>
    %20 = arith.maximumf %18, %19 : vector<8x128xf32>
    %21 = vector.extract_strided_slice %17 {offsets = [0, 256], sizes = [8, 128], strides = [1, 1]} : vector<8x512xf32> to vector<8x128xf32>
    %22 = vector.extract_strided_slice %17 {offsets = [0, 384], sizes = [8, 128], strides = [1, 1]} : vector<8x512xf32> to vector<8x128xf32>
    %23 = arith.maximumf %21, %22 : vector<8x128xf32>
    %24 = arith.maximumf %20, %23 : vector<8x128xf32>
    %c0_9 = arith.constant 0 : index
    %c0_10 = arith.constant 0 : index
    %25 = vector.load %arg5[%c0_9, %c0_10] : memref<1x128xf32, #tpu.memory_space<vmem>>, vector<1x128xf32>
    %26 = vector.broadcast %25 : vector<1x128xf32> to vector<8x128xf32>
    %27 = arith.addf %24, %26 : vector<8x128xf32>
    %cst_11 = arith.constant 0.000000e+00 : f32
    %28 = vector.broadcast %cst_11 : f32 to vector<8x128xf32>
    %29 = arith.maximumf %27, %28 : vector<8x128xf32>
    %30 = arith.truncf %29 : vector<8x128xf32> to vector<8x128xbf16>
    %c0_12 = arith.constant 0 : index
    %c0_13 = arith.constant 0 : index
    %31 = vector.load %arg6[%c0_12, %c0_13] : memref<128x128xbf16, #tpu.memory_space<vmem>>, vector<128x128xbf16>
    %cst_14 = arith.constant dense<0.000000e+00> : vector<8x128xf32>
    %32 = tpu.matmul %30, %31, %cst_14 {dimension_numbers = #tpu.dot_dimension_numbers<[1], [0], [0], [1], [0, 0, 1, 1], [], []>} : vector<8x128xbf16>, vector<128x128xbf16>, vector<8x128xf32> -> vector<8x128xf32>
    %c0_15 = arith.constant 0 : index
    %c0_16 = arith.constant 0 : index
    %33 = vector.load %arg7[%c0_15, %c0_16] : memref<1x128xf32, #tpu.memory_space<vmem>>, vector<1x128xf32>
    %34 = vector.broadcast %33 : vector<1x128xf32> to vector<8x128xf32>
    %35 = arith.addf %32, %34 : vector<8x128xf32>
    %cst_17 = arith.constant 0.000000e+00 : f32
    %36 = vector.broadcast %cst_17 : f32 to vector<8x128xf32>
    %37 = arith.maximumf %35, %36 : vector<8x128xf32>
    %38 = arith.truncf %37 : vector<8x128xf32> to vector<8x128xbf16>
    %c0_18 = arith.constant 0 : index
    %c0_19 = arith.constant 0 : index
    %39 = vector.load %arg8[%c0_18, %c0_19] : memref<128x128xbf16, #tpu.memory_space<vmem>>, vector<128x128xbf16>
    %cst_20 = arith.constant dense<0.000000e+00> : vector<8x128xf32>
    %40 = tpu.matmul %38, %39, %cst_20 {dimension_numbers = #tpu.dot_dimension_numbers<[1], [0], [0], [1], [0, 0, 1, 1], [], []>} : vector<8x128xbf16>, vector<128x128xbf16>, vector<8x128xf32> -> vector<8x128xf32>
    %c0_21 = arith.constant 0 : index
    %c0_22 = arith.constant 0 : index
    %41 = vector.load %arg9[%c0_21, %c0_22] : memref<1x128xf32, #tpu.memory_space<vmem>>, vector<1x128xf32>
    %42 = vector.broadcast %41 : vector<1x128xf32> to vector<8x128xf32>
    %43 = arith.addf %40, %42 : vector<8x128xf32>
    %c0_23 = arith.constant 0 : index
    %c0_24 = arith.constant 0 : index
    %44 = vector.load %arg10[%c0_23, %c0_24] : memref<8x128xf32, #tpu.memory_space<vmem>>, vector<8x128xf32>
    tpu.vector_store %arg10[%c0_23, %c0_24], %43 {strides = array<i32>} : memref<8x128xf32, #tpu.memory_space<vmem>>, vector<8x128xf32>,
    return
  }
  func.func @transform_0(%arg0: i32) -> (i32, i32) {
    %c0_i32 = arith.constant 0 : i32
    %c0_i32_0 = arith.constant 0 : i32
    return %arg0, %c0_i32 : i32, i32
  }
  func.func @transform_1(%arg0: i32) -> (i32, i32) {
    %c0_i32 = arith.constant 0 : i32
    %c0_i32_0 = arith.constant 0 : i32
    %c0_i32_1 = arith.constant 0 : i32
    return %c0_i32, %c0_i32_0 : i32, i32
  }
  func.func @transform_2(%arg0: i32) -> (i32, i32) {
    %c0_i32 = arith.constant 0 : i32
    %c0_i32_0 = arith.constant 0 : i32
    %c0_i32_1 = arith.constant 0 : i32
    return %c0_i32, %c0_i32_0 : i32, i32
  }
  func.func @transform_3(%arg0: i32) -> (i32, i32) {
    %c0_i32 = arith.constant 0 : i32
    %c0_i32_0 = arith.constant 0 : i32
    %c0_i32_1 = arith.constant 0 : i32
    return %c0_i32, %c0_i32_0 : i32, i32
  }
  func.func @transform_4(%arg0: i32) -> (i32, i32) {
    %c0_i32 = arith.constant 0 : i32
    %c0_i32_0 = arith.constant 0 : i32
    %c0_i32_1 = arith.constant 0 : i32
    return %c0_i32, %c0_i32_0 : i32, i32
  }
  func.func @transform_5(%arg0: i32) -> (i32, i32) {
    %c0_i32 = arith.constant 0 : i32
    %c0_i32_0 = arith.constant 0 : i32
    %c0_i32_1 = arith.constant 0 : i32
    return %c0_i32, %c0_i32_0 : i32, i32
  }
  func.func @transform_6(%arg0: i32) -> (i32, i32) {
    %c0_i32 = arith.constant 0 : i32
    %c0_i32_0 = arith.constant 0 : i32
    %c0_i32_1 = arith.constant 0 : i32
    return %c0_i32, %c0_i32_0 : i32, i32
  }
  func.func @transform_7(%arg0: i32) -> (i32, i32) {
    %c0_i32 = arith.constant 0 : i32
    %c0_i32_0 = arith.constant 0 : i32
    %c0_i32_1 = arith.constant 0 : i32
    return %c0_i32, %c0_i32_0 : i32, i32
  }
  func.func @transform_8(%arg0: i32) -> (i32, i32) {
    %c0_i32 = arith.constant 0 : i32
    %c0_i32_0 = arith.constant 0 : i32
    %c0_i32_1 = arith.constant 0 : i32
    return %c0_i32, %c0_i32_0 : i32, i32
  }
  func.func @transform_9(%arg0: i32) -> (i32, i32) {
    %c0_i32 = arith.constant 0 : i32
    %c0_i32_0 = arith.constant 0 : i32
    return %arg0, %c0_i32 : i32, i32
  }
}

</mosaic_0001>

<llo_original>
// kernel: classifier_forward.1
$region0: #{classifier_forward.1}
  #allocation0 [shape = 'u32[]', space=smem, size = 0x4, offset = 0x4, fixed_abs, tag = 'smem constant byte address 0x4 - core index']
  #allocation1 [shape = 'u32[144,128]{1,0:T(1,128)}', space=vmem, size = 0x12000, scoped, tag = 'internal scratch']
  %s0 = inlined_call_operand.vmem [shape: bf16[8,256], index: 0, kind: input, shape index: {}]
  %s1 = inlined_call_operand.hbm [shape: bf16[256,1024], index: 1, kind: input, shape index: {}]
  %s2 = inlined_call_operand.vmem [shape: f32[1,256], index: 2, kind: input, shape index: {}]
  %s3 = inlined_call_operand.hbm [shape: bf16[256,512], index: 3, kind: input, shape index: {}]
  %s4 = inlined_call_operand.vmem [shape: f32[1,128], index: 4, kind: input, shape index: {}]
  %s5 = inlined_call_operand.vmem [shape: bf16[128,128], index: 5, kind: input, shape index: {}]
  %s6 = inlined_call_operand.vmem [shape: f32[1,128], index: 6, kind: input, shape index: {}]
  %s7 = inlined_call_operand.vmem [shape: bf16[128,128], index: 7, kind: input, shape index: {}]
  %s8 = inlined_call_operand.vmem [shape: f32[1,128], index: 8, kind: input, shape index: {}]
  %s9 = inlined_call_operand.vmem [shape: f32[8,128], index: 9, kind: output, shape index: {}]
  %s10 = sld [smem:[#allocation0]]
  $region54: #{classifier_forward.1} parent=0
    _
  %s12 = ssub.s32 1, %s10
  %s13 = scalar_select 0, %s12, %s10
  $region1: #{classifier_forward.1} parent=0
    #allocation2 [shape = 'u8[524288]{0}', space=vmem, size = 0x80000, scoped, tag = 'input window, operand 1, single buffered']
    #allocation3 [shape = 's32[1]{0}', space=sflag, size = 0x4, scoped, tag = 'scoped memory for classifier_forward.1']
    #allocation4 [shape = 'u8[262144]{0}', space=vmem, size = 0x40000, scoped, tag = 'input window, operand 3, single buffered']
    #allocation5 [shape = 's32[1]{0}', space=sflag, size = 0x4, scoped, tag = 'scoped memory for classifier_forward.1']
    %14 = vsyncpa [#allocation3], 0
    %15 = vsyncpa [#allocation5], 0
    // Predicated region
    $region2: #{classifier_forward.1} parent=1 // pred_check
      _
    $region3: #{classifier_forward.1} parent=1 // pred_check_branch
      %17 = sbr.rel (0) target = $region5
    $region4: #{classifier_forward.1} parent=1 // pred_region
      _
    $region5: #{classifier_forward.1} parent=1 // pred_fallthru
      _
    // Predicated region
    $region6: #{classifier_forward.1} parent=1 // pred_check
      _
    $region7: #{classifier_forward.1} parent=1 // pred_check_branch
      %19 = sbr.rel (0) target = $region9
    $region8: #{classifier_forward.1} parent=1 // pred_region
      %s21 = ssub.s32 16384, 16384
      %22 = vsyncadd [#allocation3], %s21
      %s23 = sshll.u32 [#allocation2], 4
      %s24 = int_to_ptr.vmem [resolvable:$true] %s23
      %29 = dma.hbm_to_vmem [thread:$0]  %s1, 16384, %s24, [#allocation3], 512, 512, 32
    $region9: #{classifier_forward.1} parent=1 // pred_fallthru
      _
    // Predicated region
    $region10: #{classifier_forward.1} parent=1 // pred_check
      _
    $region11: #{classifier_forward.1} parent=1 // pred_check_branch
      %31 = sbr.rel (0) target = $region13
    $region12: #{classifier_forward.1} parent=1 // pred_region
      _
    $region13: #{classifier_forward.1} parent=1 // pred_fallthru
      _
    // Predicated region
    $region14: #{classifier_forward.1} parent=1 // pred_check
      _
    $region15: #{classifier_forward.1} parent=1 // pred_check_branch
      %33 = sbr.rel (0) target = $region17
    $region16: #{classifier_forward.1} parent=1 // pred_region
      %s35 = ssub.s32 8192, 8192
      %36 = vsyncadd [#allocation5], %s35
      %s37 = sshll.u32 [#allocation4], 4
      %s38 = int_to_ptr.vmem [resolvable:$true] %s37
      %43 = dma.hbm_to_vmem [thread:$0]  %s3, 8192, %s38, [#allocation5], 256, 256, 16
    $region17: #{classifier_forward.1} parent=1 // pred_fallthru
      _
    // Predicated region
    $region18: #{classifier_forward.1} parent=1 // pred_check
      _
    $region19: #{classifier_forward.1} parent=1 // pred_check_branch
      %45 = sbr.rel (0) target = $region21
    $region20: #{classifier_forward.1} parent=1 // pred_region
      _
    $region21: #{classifier_forward.1} parent=1 // pred_fallthru
      _
    // Predicated region
    $region22: #{classifier_forward.1} parent=1 // pred_check
      _
    $region23: #{classifier_forward.1} parent=1 // pred_check_branch
      %47 = sbr.rel (0) target = $region25
    $region24: #{classifier_forward.1} parent=1 // pred_region
      _
    $region25: #{classifier_forward.1} parent=1 // pred_fallthru
      _
    // Predicated region
    $region26: #{classifier_forward.1} parent=1 // pred_check
      _
    $region27: #{classifier_forward.1} parent=1 // pred_check_branch
      %49 = sbr.rel (0) target = $region29
    $region28: #{classifier_forward.1} parent=1 // pred_region
      _
    $region29: #{classifier_forward.1} parent=1 // pred_fallthru
      _
    // Predicated region
    $region30: #{classifier_forward.1} parent=1 // pred_check
      _
    $region31: #{classifier_forward.1} parent=1 // pred_check_branch
      %51 = sbr.rel (0) target = $region33
    $region32: #{classifier_forward.1} parent=1 // pred_region
      _
    $region33: #{classifier_forward.1} parent=1 // pred_fallthru
      _
    // Predicated region
    $region34: #{classifier_forward.1} parent=1 // pred_check
      _
    $region35: #{classifier_forward.1} parent=1 // pred_check_branch
      %53 = sbr.rel (0) target = $region37
    $region36: #{classifier_forward.1} parent=1 // pred_region
      _
    $region37: #{classifier_forward.1} parent=1 // pred_fallthru
      _
    // Predicated region
    $region38: #{classifier_forward.1} parent=1 // pred_check
      _
    $region39: #{classifier_forward.1} parent=1 // pred_check_branch
      %55 = sbr.rel (0) target = $region41
    $region40: #{classifier_forward.1} parent=1 // pred_region
      %56 = dma.done [#allocation3], 16384
    $region41: #{classifier_forward.1} parent=1 // pred_fallthru
      _
    // Predicated region
    $region42: #{classifier_forward.1} parent=1 // pred_check
      _
    $region43: #{classifier_forward.1} parent=1 // pred_check_branch
      %58 = sbr.rel (0) target = $region45
    $region44: #{classifier_forward.1} parent=1 // pred_region
      %59 = dma.done [#allocation5], 8192
    $region45: #{classifier_forward.1} parent=1 // pred_fallthru
      _
    %v61 = vld [vmem:[%s0] sm:$0xff]
    %v62 = vld [vmem:[#allocation2] sm:$0xff]
    %v63 = vld [vmem:[#allocation2 + $0x8] sm:$0xff]
    %v64 = vld [vmem:[#allocation2 + $0x10] sm:$0xff]
    %v65 = vld [vmem:[#allocation2 + $0x18] sm:$0xff]
    %v66 = vld [vmem:[#allocation2 + $0x20] sm:$0xff]
    %v67 = vld [vmem:[#allocation2 + $0x28] sm:$0xff]
    %v68 = vld [vmem:[#allocation2 + $0x30] sm:$0xff]
    %v69 = vld [vmem:[#allocation2 + $0x38] sm:$0xff]
    %v70 = vld [vmem:[#allocation2 + $0x40] sm:$0xff]
    %v71 = vld [vmem:[#allocation2 + $0x48] sm:$0xff]
    %v72 = vld [vmem:[#allocation2 + $0x50] sm:$0xff]
    %v73 = vld [vmem:[#allocation2 + $0x58] sm:$0xff]
    %v74 = vld [vmem:[#allocation2 + $0x60] sm:$0xff]
    %v75 = vld [vmem:[#allocation2 + $0x68] sm:$0xff]
    %v76 = vld [vmem:[#allocation2 + $0x70] sm:$0xff]
    %v77 = vld [vmem:[#allocation2 + $0x78] sm:$0xff]
    %v78 = vld [vmem:[#allocation2 + $0x80] sm:$0xff]
    %v79 = vld [vmem:[#allocation2 + $0x88] sm:$0xff]
    %v80 = vld [vmem:[#allocation2 + $0x90] sm:$0xff]
    %v81 = vld [vmem:[#allocation2 + $0x98] sm:$0xff]
    %v82 = vld [vmem:[#allocation2 + $0xa0] sm:$0xff]
    %v83 = vld [vmem:[#allocation2 + $0xa8] sm:$0xff]
    %v84 = vld [vmem:[#allocation2 + $0xb0] sm:$0xff]
    %v85 = vld [vmem:[#allocation2 + $0xb8] sm:$0xff]
    %v86 = vld [vmem:[#allocation2 + $0xc0] sm:$0xff]
    %v87 = vld [vmem:[#allocation2 + $0xc8] sm:$0xff]
    %v88 = vld [vmem:[#allocation2 + $0xd0] sm:$0xff]
    %v89 = vld [vmem:[#allocation2 + $0xd8] sm:$0xff]
    %v90 = vld [vmem:[#allocation2 + $0xe0] sm:$0xff]
    %v91 = vld [vmem:[#allocation2 + $0xe8] sm:$0xff]
    %v92 = vld [vmem:[#allocation2 + $0xf0] sm:$0xff]
    %v93 = vld [vmem:[#allocation2 + $0xf8] sm:$0xff]
    %v94 = vld [vmem:[#allocation2 + $0x100] sm:$0xff]
    %v95 = vld [vmem:[#allocation2 + $0x108] sm:$0xff]
    %v96 = vld [vmem:[#allocation2 + $0x110] sm:$0xff]
    %v97 = vld [vmem:[#allocation2 + $0x118] sm:$0xff]
    %v98 = vld [vmem:[#allocation2 + $0x120] sm:$0xff]
    %v99 = vld [vmem:[#allocation2 + $0x128] sm:$0xff]
    %v100 = vld [vmem:[#allocation2 + $0x130] sm:$0xff]
    %v101 = vld [vmem:[#allocation2 + $0x138] sm:$0xff]
    %v102 = vld [vmem:[#allocation2 + $0x140] sm:$0xff]
    %v103 = vld [vmem:[#allocation2 + $0x148] sm:$0xff]
    %v104 = vld [vmem:[#allocation2 + $0x150] sm:$0xff]
    %v105 = vld [vmem:[#allocation2 + $0x158] sm:$0xff]
    %v106 = vld [vmem:[#allocation2 + $0x160] sm:$0xff]
    %v107 = vld [vmem:[#allocation2 + $0x168] sm:$0xff]
    %v108 = vld [vmem:[#allocation2 + $0x170] sm:$0xff]
    %v109 = vld [vmem:[#allocation2 + $0x178] sm:$0xff]
    %v110 = vld [vmem:[#allocation2 + $0x180] sm:$0xff]
    %v111 = vld [vmem:[#allocation2 + $0x188] sm:$0xff]
    %v112 = vld [vmem:[#allocation2 + $0x190] sm:$0xff]
    %v113 = vld [vmem:[#allocation2 + $0x198] sm:$0xff]
    %v114 = vld [vmem:[#allocation2 + $0x1a0] sm:$0xff]
    %v115 = vld [vmem:[#allocation2 + $0x1a8] sm:$0xff]
    %v116 = vld [vmem:[#allocation2 + $0x1b0] sm:$0xff]
    %v117 = vld [vmem:[#allocation2 + $0x1b8] sm:$0xff]
    %v118 = vld [vmem:[#allocation2 + $0x1c0] sm:$0xff]
    %v119 = vld [vmem:[#allocation2 + $0x1c8] sm:$0xff]
    %v120 = vld [vmem:[#allocation2 + $0x1d0] sm:$0xff]
    %v121 = vld [vmem:[#allocation2 + $0x1d8] sm:$0xff]
    %v122 = vld [vmem:[#allocation2 + $0x1e0] sm:$0xff]
    %v123 = vld [vmem:[#allocation2 + $0x1e8] sm:$0xff]
    %v124 = vld [vmem:[#allocation2 + $0x1f0] sm:$0xff]
    %v125 = vld [vmem:[#allocation2 + $0x1f8] sm:$0xff]
    %v126 = vld [vmem:[#allocation2 + $0x200] sm:$0xff]
    %v127 = vld [vmem:[#allocation2 + $0x208] sm:$0xff]
    %v128 = vld [vmem:[#allocation2 + $0x210] sm:$0xff]
    %v129 = vld [vmem:[#allocation2 + $0x218] sm:$0xff]
    %v130 = vld [vmem:[#allocation2 + $0x220] sm:$0xff]
    %v131 = vld [vmem:[#allocation2 + $0x228] sm:$0xff]
    %v132 = vld [vmem:[#allocation2 + $0x230] sm:$0xff]
    %v133 = vld [vmem:[#allocation2 + $0x238] sm:$0xff]
    %v134 = vld [vmem:[#allocation2 + $0x240] sm:$0xff]
    %v135 = vld [vmem:[#allocation2 + $0x248] sm:$0xff]
    %v136 = vld [vmem:[#allocation2 + $0x250] sm:$0xff]
    %v137 = vld [vmem:[#allocation2 + $0x258] sm:$0xff]
    %v138 = vld [vmem:[#allocation2 + $0x260] sm:$0xff]
    %v139 = vld [vmem:[#allocation2 + $0x268] sm:$0xff]
    %v140 = vld [vmem:[#allocation2 + $0x270] sm:$0xff]
    %v141 = vld [vmem:[#allocation2 + $0x278] sm:$0xff]
    %v142 = vld [vmem:[#allocation2 + $0x280] sm:$0xff]
    %v143 = vld [vmem:[#allocation2 + $0x288] sm:$0xff]
    %v144 = vld [vmem:[#allocation2 + $0x290] sm:$0xff]
    %v145 = vld [vmem:[#allocation2 + $0x298] sm:$0xff]
    %v146 = vld [vmem:[#allocation2 + $0x2a0] sm:$0xff]
    %v147 = vld [vmem:[#allocation2 + $0x2a8] sm:$0xff]
    %v148 = vld [vmem:[#allocation2 + $0x2b0] sm:$0xff]
    %v149 = vld [vmem:[#allocation2 + $0x2b8] sm:$0xff]
    %v150 = vld [vmem:[#allocation2 + $0x2c0] sm:$0xff]
    %v151 = vld [vmem:[#allocation2 + $0x2c8] sm:$0xff]
    %v152 = vld [vmem:[#allocation2 + $0x2d0] sm:$0xff]
    %v153 = vld [vmem:[#allocation2 + $0x2d8] sm:$0xff]
    %v154 = vld [vmem:[#allocation2 + $0x2e0] sm:$0xff]
    %v155 = vld [vmem:[#allocation2 + $0x2e8] sm:$0xff]
    %v156 = vld [vmem:[#allocation2 + $0x2f0] sm:$0xff]
    %v157 = vld [vmem:[#allocation2 + $0x2f8] sm:$0xff]
    %v158 = vld [vmem:[#allocation2 + $0x300] sm:$0xff]
    %v159 = vld [vmem:[#allocation2 + $0x308] sm:$0xff]
    %v160 = vld [vmem:[#allocation2 + $0x310] sm:$0xff]
    %v161 = vld [vmem:[#allocation2 + $0x318] sm:$0xff]
    %v162 = vld [vmem:[#allocation2 + $0x320] sm:$0xff]
    %v163 = vld [vmem:[#allocation2 + $0x328] sm:$0xff]
    %v164 = vld [vmem:[#allocation2 + $0x330] sm:$0xff]
    %v165 = vld [vmem:[#allocation2 + $0x338] sm:$0xff]
    %v166 = vld [vmem:[#allocation2 + $0x340] sm:$0xff]
    %v167 = vld [vmem:[#allocation2 + $0x348] sm:$0xff]
    %v168 = vld [vmem:[#allocation2 + $0x350] sm:$0xff]
    %v169 = vld [vmem:[#allocation2 + $0x358] sm:$0xff]
    %v170 = vld [vmem:[#allocation2 + $0x360] sm:$0xff]
    %v171 = vld [vmem:[#allocation2 + $0x368] sm:$0xff]
    %v172 = vld [vmem:[#allocation2 + $0x370] sm:$0xff]
    %v173 = vld [vmem:[#allocation2 + $0x378] sm:$0xff]
    %v174 = vld [vmem:[#allocation2 + $0x380] sm:$0xff]
    %v175 = vld [vmem:[#allocation2 + $0x388] sm:$0xff]
    %v176 = vld [vmem:[#allocation2 + $0x390] sm:$0xff]
    %v177 = vld [vmem:[#allocation2 + $0x398] sm:$0xff]
    %v178 = vld [vmem:[#allocation2 + $0x3a0] sm:$0xff]
    %v179 = vld [vmem:[#allocation2 + $0x3a8] sm:$0xff]
    %v180 = vld [vmem:[#allocation2 + $0x3b0] sm:$0xff]
    %v181 = vld [vmem:[#allocation2 + $0x3b8] sm:$0xff]
    %v182 = vld [vmem:[#allocation2 + $0x3c0] sm:$0xff]
    %v183 = vld [vmem:[#allocation2 + $0x3c8] sm:$0xff]
    %v184 = vld [vmem:[#allocation2 + $0x3d0] sm:$0xff]
    %v185 = vld [vmem:[#allocation2 + $0x3d8] sm:$0xff]
    %v186 = vld [vmem:[#allocation2 + $0x3e0] sm:$0xff]
    %v187 = vld [vmem:[#allocation2 + $0x3e8] sm:$0xff]
    %v188 = vld [vmem:[#allocation2 + $0x3f0] sm:$0xff]
    %v189 = vld [vmem:[#allocation2 + $0x3f8] sm:$0xff]
    %v191 = vunpack.c.l.b16 %v61
    %v192 = vunpack.c.h.b16 %v61
    %v193 = vpack.c.b16 %v191, %v191
    %v194 = vpack.c.b16 %v192, %v192
    %v325 = vunpack.c.l.b16 %v62
    %v326 = vunpack.c.h.b16 %v62
    %v327 = vunpack.c.l.b16 %v63
    %v328 = vunpack.c.h.b16 %v63
    %v329 = vunpack.c.l.b16 %v64
    %v330 = vunpack.c.h.b16 %v64
    %v331 = vunpack.c.l.b16 %v65
    %v332 = vunpack.c.h.b16 %v65
    %v333 = vunpack.c.l.b16 %v66
    %v334 = vunpack.c.h.b16 %v66
    %v335 = vunpack.c.l.b16 %v67
    %v336 = vunpack.c.h.b16 %v67
    %v337 = vunpack.c.l.b16 %v68
    %v338 = vunpack.c.h.b16 %v68
    %v339 = vunpack.c.l.b16 %v69
    %v340 = vunpack.c.h.b16 %v69
    %v341 = vunpack.c.l.b16 %v70
    %v342 = vunpack.c.h.b16 %v70
    %v343 = vunpack.c.l.b16 %v71
    %v344 = vunpack.c.h.b16 %v71
    %v345 = vunpack.c.l.b16 %v72
    %v346 = vunpack.c.h.b16 %v72
    %v347 = vunpack.c.l.b16 %v73
    %v348 = vunpack.c.h.b16 %v73
    %v349 = vunpack.c.l.b16 %v74
    %v350 = vunpack.c.h.b16 %v74
    %v351 = vunpack.c.l.b16 %v75
    %v352 = vunpack.c.h.b16 %v75
    %v353 = vunpack.c.l.b16 %v76
    %v354 = vunpack.c.h.b16 %v76
    %v355 = vunpack.c.l.b16 %v77
    %v356 = vunpack.c.h.b16 %v77
    %v357 = vunpack.c.l.b16 %v78
    %v358 = vunpack.c.h.b16 %v78
    %v359 = vunpack.c.l.b16 %v79
    %v360 = vunpack.c.h.b16 %v79
    %v361 = vunpack.c.l.b16 %v80
    %v362 = vunpack.c.h.b16 %v80
    %v363 = vunpack.c.l.b16 %v81
    %v364 = vunpack.c.h.b16 %v81
    %v365 = vunpack.c.l.b16 %v82
    %v366 = vunpack.c.h.b16 %v82
    %v367 = vunpack.c.l.b16 %v83
    %v368 = vunpack.c.h.b16 %v83
    %v369 = vunpack.c.l.b16 %v84
    %v370 = vunpack.c.h.b16 %v84
    %v371 = vunpack.c.l.b16 %v85
    %v372 = vunpack.c.h.b16 %v85
    %v373 = vunpack.c.l.b16 %v86
    %v374 = vunpack.c.h.b16 %v86
    %v375 = vunpack.c.l.b16 %v87
    %v376 = vunpack.c.h.b16 %v87
    %v377 = vunpack.c.l.b16 %v88
    %v378 = vunpack.c.h.b16 %v88
    %v379 = vunpack.c.l.b16 %v89
    %v380 = vunpack.c.h.b16 %v89
    %v381 = vunpack.c.l.b16 %v90
    %v382 = vunpack.c.h.b16 %v90
    %v383 = vunpack.c.l.b16 %v91
    %v384 = vunpack.c.h.b16 %v91
    %v385 = vunpack.c.l.b16 %v92
    %v386 = vunpack.c.h.b16 %v92
    %v387 = vunpack.c.l.b16 %v93
    %v388 = vunpack.c.h.b16 %v93
    %v389 = vunpack.c.l.b16 %v94
    %v390 = vunpack.c.h.b16 %v94
    %v391 = vunpack.c.l.b16 %v95
    %v392 = vunpack.c.h.b16 %v95
    %v393 = vunpack.c.l.b16 %v96
    %v394 = vunpack.c.h.b16 %v96
    %v395 = vunpack.c.l.b16 %v97
    %v396 = vunpack.c.h.b16 %v97
    %v397 = vunpack.c.l.b16 %v98
    %v398 = vunpack.c.h.b16 %v98
    %v399 = vunpack.c.l.b16 %v99
    %v400 = vunpack.c.h.b16 %v99
    %v401 = vunpack.c.l.b16 %v100
    %v402 = vunpack.c.h.b16 %v100
    %v403 = vunpack.c.l.b16 %v101
    %v404 = vunpack.c.h.b16 %v101
    %v405 = vunpack.c.l.b16 %v102
    %v406 = vunpack.c.h.b16 %v102
    %v407 = vunpack.c.l.b16 %v103
    %v408 = vunpack.c.h.b16 %v103
    %v409 = vunpack.c.l.b16 %v104
    %v410 = vunpack.c.h.b16 %v104
    %v411 = vunpack.c.l.b16 %v105
    %v412 = vunpack.c.h.b16 %v105
    %v413 = vunpack.c.l.b16 %v106
    %v414 = vunpack.c.h.b16 %v106
    %v415 = vunpack.c.l.b16 %v107
    %v416 = vunpack.c.h.b16 %v107
    %v417 = vunpack.c.l.b16 %v108
    %v418 = vunpack.c.h.b16 %v108
    %v419 = vunpack.c.l.b16 %v109
    %v420 = vunpack.c.h.b16 %v109
    %v421 = vunpack.c.l.b16 %v110
    %v422 = vunpack.c.h.b16 %v110
    %v423 = vunpack.c.l.b16 %v111
    %v424 = vunpack.c.h.b16 %v111
    %v425 = vunpack.c.l.b16 %v112
    %v426 = vunpack.c.h.b16 %v112
    %v427 = vunpack.c.l.b16 %v113
    %v428 = vunpack.c.h.b16 %v113
    %v429 = vunpack.c.l.b16 %v114
    %v430 = vunpack.c.h.b16 %v114
    %v431 = vunpack.c.l.b16 %v115
    %v432 = vunpack.c.h.b16 %v115
    %v433 = vunpack.c.l.b16 %v116
    %v434 = vunpack.c.h.b16 %v116
    %v435 = vunpack.c.l.b16 %v117
    %v436 = vunpack.c.h.b16 %v117
    %v437 = vunpack.c.l.b16 %v118
    %v438 = vunpack.c.h.b16 %v118
    %v439 = vunpack.c.l.b16 %v119
    %v440 = vunpack.c.h.b16 %v119
    %v441 = vunpack.c.l.b16 %v120
    %v442 = vunpack.c.h.b16 %v120
    %v443 = vunpack.c.l.b16 %v121
    %v444 = vunpack.c.h.b16 %v121
    %v445 = vunpack.c.l.b16 %v122
    %v446 = vunpack.c.h.b16 %v122
    %v447 = vunpack.c.l.b16 %v123
    %v448 = vunpack.c.h.b16 %v123
    %v449 = vunpack.c.l.b16 %v124
    %v450 = vunpack.c.h.b16 %v124
    %v451 = vunpack.c.l.b16 %v125
    %v452 = vunpack.c.h.b16 %v125
    %v453 = vunpack.c.l.b16 %v126
    %v454 = vunpack.c.h.b16 %v126
    %v455 = vunpack.c.l.b16 %v127
    %v456 = vunpack.c.h.b16 %v127
    %v457 = vunpack.c.l.b16 %v128
    %v458 = vunpack.c.h.b16 %v128
    %v459 = vunpack.c.l.b16 %v129
    %v460 = vunpack.c.h.b16 %v129
    %v461 = vunpack.c.l.b16 %v130
    %v462 = vunpack.c.h.b16 %v130
    %v463 = vunpack.c.l.b16 %v131
    %v464 = vunpack.c.h.b16 %v131
    %v465 = vunpack.c.l.b16 %v132
    %v466 = vunpack.c.h.b16 %v132
    %v467 = vunpack.c.l.b16 %v133
    %v468 = vunpack.c.h.b16 %v133
    %v469 = vunpack.c.l.b16 %v134
    %v470 = vunpack.c.h.b16 %v134
    %v471 = vunpack.c.l.b16 %v135
    %v472 = vunpack.c.h.b16 %v135
    %v473 = vunpack.c.l.b16 %v136
    %v474 = vunpack.c.h.b16 %v136
    %v475 = vunpack.c.l.b16 %v137
    %v476 = vunpack.c.h.b16 %v137
    %v477 = vunpack.c.l.b16 %v138
    %v478 = vunpack.c.h.b16 %v138
    %v479 = vunpack.c.l.b16 %v139
    %v480 = vunpack.c.h.b16 %v139
    %v481 = vunpack.c.l.b16 %v140
    %v482 = vunpack.c.h.b16 %v140
    %v483 = vunpack.c.l.b16 %v141
    %v484 = vunpack.c.h.b16 %v141
    %v485 = vunpack.c.l.b16 %v142
    %v486 = vunpack.c.h.b16 %v142
    %v487 = vunpack.c.l.b16 %v143
    %v488 = vunpack.c.h.b16 %v143
    %v489 = vunpack.c.l.b16 %v144
    %v490 = vunpack.c.h.b16 %v144
    %v491 = vunpack.c.l.b16 %v145
    %v492 = vunpack.c.h.b16 %v145
    %v493 = vunpack.c.l.b16 %v146
    %v494 = vunpack.c.h.b16 %v146
    %v495 = vunpack.c.l.b16 %v147
    %v496 = vunpack.c.h.b16 %v147
    %v497 = vunpack.c.l.b16 %v148
    %v498 = vunpack.c.h.b16 %v148
    %v499 = vunpack.c.l.b16 %v149
    %v500 = vunpack.c.h.b16 %v149
    %v501 = vunpack.c.l.b16 %v150
    %v502 = vunpack.c.h.b16 %v150
    %v503 = vunpack.c.l.b16 %v151
    %v504 = vunpack.c.h.b16 %v151
    %v505 = vunpack.c.l.b16 %v152
    %v506 = vunpack.c.h.b16 %v152
    %v507 = vunpack.c.l.b16 %v153
    %v508 = vunpack.c.h.b16 %v153
    %v509 = vunpack.c.l.b16 %v154
    %v510 = vunpack.c.h.b16 %v154
    %v511 = vunpack.c.l.b16 %v155
    %v512 = vunpack.c.h.b16 %v155
    %v513 = vunpack.c.l.b16 %v156
    %v514 = vunpack.c.h.b16 %v156
    %v515 = vunpack.c.l.b16 %v157
    %v516 = vunpack.c.h.b16 %v157
    %v517 = vunpack.c.l.b16 %v158
    %v518 = vunpack.c.h.b16 %v158
    %v519 = vunpack.c.l.b16 %v159
    %v520 = vunpack.c.h.b16 %v159
    %v521 = vunpack.c.l.b16 %v160
    %v522 = vunpack.c.h.b16 %v160
    %v523 = vunpack.c.l.b16 %v161
    %v524 = vunpack.c.h.b16 %v161
    %v525 = vunpack.c.l.b16 %v162
    %v526 = vunpack.c.h.b16 %v162
    %v527 = vunpack.c.l.b16 %v163
    %v528 = vunpack.c.h.b16 %v163
    %v529 = vunpack.c.l.b16 %v164
    %v530 = vunpack.c.h.b16 %v164
    %v531 = vunpack.c.l.b16 %v165
    %v532 = vunpack.c.h.b16 %v165
    %v533 = vunpack.c.l.b16 %v166
    %v534 = vunpack.c.h.b16 %v166
    %v535 = vunpack.c.l.b16 %v167
    %v536 = vunpack.c.h.b16 %v167
    %v537 = vunpack.c.l.b16 %v168
    %v538 = vunpack.c.h.b16 %v168
    %v539 = vunpack.c.l.b16 %v169
    %v540 = vunpack.c.h.b16 %v169
    %v541 = vunpack.c.l.b16 %v170
    %v542 = vunpack.c.h.b16 %v170
    %v543 = vunpack.c.l.b16 %v171
    %v544 = vunpack.c.h.b16 %v171
    %v545 = vunpack.c.l.b16 %v172
    %v546 = vunpack.c.h.b16 %v172
    %v547 = vunpack.c.l.b16 %v173
    %v548 = vunpack.c.h.b16 %v173
    %v549 = vunpack.c.l.b16 %v174
    %v550 = vunpack.c.h.b16 %v174
    %v551 = vunpack.c.l.b16 %v175
    %v552 = vunpack.c.h.b16 %v175
    %v553 = vunpack.c.l.b16 %v176
    %v554 = vunpack.c.h.b16 %v176
    %v555 = vunpack.c.l.b16 %v177
    %v556 = vunpack.c.h.b16 %v177
    %v557 = vunpack.c.l.b16 %v178
    %v558 = vunpack.c.h.b16 %v178
    %v559 = vunpack.c.l.b16 %v179
    %v560 = vunpack.c.h.b16 %v179
    %v561 = vunpack.c.l.b16 %v180
    %v562 = vunpack.c.h.b16 %v180
    %v563 = vunpack.c.l.b16 %v181
    %v564 = vunpack.c.h.b16 %v181
    %v565 = vunpack.c.l.b16 %v182
    %v566 = vunpack.c.h.b16 %v182
    %v567 = vunpack.c.l.b16 %v183
    %v568 = vunpack.c.h.b16 %v183
    %v569 = vunpack.c.l.b16 %v184
    %v570 = vunpack.c.h.b16 %v184
    %v571 = vunpack.c.l.b16 %v185
    %v572 = vunpack.c.h.b16 %v185
    %v573 = vunpack.c.l.b16 %v186
    %v574 = vunpack.c.h.b16 %v186
    %v575 = vunpack.c.l.b16 %v187
    %v576 = vunpack.c.h.b16 %v187
    %v577 = vunpack.c.l.b16 %v188
    %v578 = vunpack.c.h.b16 %v188
    %v579 = vunpack.c.l.b16 %v189
    %v580 = vunpack.c.h.b16 %v189
    %v581 = vpack.c.b16 %v333, %v325
    %v582 = vpack.c.b16 %v334, %v326
    %v583 = vpack.c.b16 %v335, %v327
    %v584 = vpack.c.b16 %v336, %v328
    %v585 = vpack.c.b16 %v337, %v329
    %v586 = vpack.c.b16 %v338, %v330
    %v587 = vpack.c.b16 %v339, %v331
    %v588 = vpack.c.b16 %v340, %v332
    %v589 = vpack.c.b16 %v349, %v341
    %v590 = vpack.c.b16 %v350, %v342
    %v591 = vpack.c.b16 %v351, %v343
    %v592 = vpack.c.b16 %v352, %v344
    %v593 = vpack.c.b16 %v353, %v345
    %v594 = vpack.c.b16 %v354, %v346
    %v595 = vpack.c.b16 %v355, %v347
    %v596 = vpack.c.b16 %v356, %v348
    %v597 = vpack.c.b16 %v365, %v357
    %v598 = vpack.c.b16 %v366, %v358
    %v599 = vpack.c.b16 %v367, %v359
    %v600 = vpack.c.b16 %v368, %v360
    %v601 = vpack.c.b16 %v369, %v361
    %v602 = vpack.c.b16 %v370, %v362
    %v603 = vpack.c.b16 %v371, %v363
    %v604 = vpack.c.b16 %v372, %v364
    %v605 = vpack.c.b16 %v381, %v373
    %v606 = vpack.c.b16 %v382, %v374
    %v607 = vpack.c.b16 %v383, %v375
    %v608 = vpack.c.b16 %v384, %v376
    %v609 = vpack.c.b16 %v385, %v377
    %v610 = vpack.c.b16 %v386, %v378
    %v611 = vpack.c.b16 %v387, %v379
    %v612 = vpack.c.b16 %v388, %v380
    %v613 = vpack.c.b16 %v397, %v389
    %v614 = vpack.c.b16 %v398, %v390
    %v615 = vpack.c.b16 %v399, %v391
    %v616 = vpack.c.b16 %v400, %v392
    %v617 = vpack.c.b16 %v401, %v393
    %v618 = vpack.c.b16 %v402, %v394
    %v619 = vpack.c.b16 %v403, %v395
    %v620 = vpack.c.b16 %v404, %v396
    %v621 = vpack.c.b16 %v413, %v405
    %v622 = vpack.c.b16 %v414, %v406
    %v623 = vpack.c.b16 %v415, %v407
    %v624 = vpack.c.b16 %v416, %v408
    %v625 = vpack.c.b16 %v417, %v409
    %v626 = vpack.c.b16 %v418, %v410
    %v627 = vpack.c.b16 %v419, %v411
    %v628 = vpack.c.b16 %v420, %v412
    %v629 = vpack.c.b16 %v429, %v421
    %v630 = vpack.c.b16 %v430, %v422
    %v631 = vpack.c.b16 %v431, %v423
    %v632 = vpack.c.b16 %v432, %v424
    %v633 = vpack.c.b16 %v433, %v425
    %v634 = vpack.c.b16 %v434, %v426
    %v635 = vpack.c.b16 %v435, %v427
    %v636 = vpack.c.b16 %v436, %v428
    %v637 = vpack.c.b16 %v445, %v437
    %v638 = vpack.c.b16 %v446, %v438
    %v639 = vpack.c.b16 %v447, %v439
    %v640 = vpack.c.b16 %v448, %v440
    %v641 = vpack.c.b16 %v449, %v441
    %v642 = vpack.c.b16 %v450, %v442
    %v643 = vpack.c.b16 %v451, %v443
    %v644 = vpack.c.b16 %v452, %v444
    %v645 = vpack.c.b16 %v461, %v453
    %v646 = vpack.c.b16 %v462, %v454
    %v647 = vpack.c.b16 %v463, %v455
    %v648 = vpack.c.b16 %v464, %v456
    %v649 = vpack.c.b16 %v465, %v457
    %v650 = vpack.c.b16 %v466, %v458
    %v651 = vpack.c.b16 %v467, %v459
    %v652 = vpack.c.b16 %v468, %v460
    %v653 = vpack.c.b16 %v477, %v469
    %v654 = vpack.c.b16 %v478, %v470
    %v655 = vpack.c.b16 %v479, %v471
    %v656 = vpack.c.b16 %v480, %v472
    %v657 = vpack.c.b16 %v481, %v473
    %v658 = vpack.c.b16 %v482, %v474
    %v659 = vpack.c.b16 %v483, %v475
    %v660 = vpack.c.b16 %v484, %v476
    %v661 = vpack.c.b16 %v493, %v485
    %v662 = vpack.c.b16 %v494, %v486
    %v663 = vpack.c.b16 %v495, %v487
    %v664 = vpack.c.b16 %v496, %v488
    %v665 = vpack.c.b16 %v497, %v489
    %v666 = vpack.c.b16 %v498, %v490
    %v667 = vpack.c.b16 %v499, %v491
    %v668 = vpack.c.b16 %v500, %v492
    %v669 = vpack.c.b16 %v509, %v501
    %v670 = vpack.c.b16 %v510, %v502
    %v671 = vpack.c.b16 %v511, %v503
    %v672 = vpack.c.b16 %v512, %v504
    %v673 = vpack.c.b16 %v513, %v505
    %v674 = vpack.c.b16 %v514, %v506
    %v675 = vpack.c.b16 %v515, %v507
    %v676 = vpack.c.b16 %v516, %v508
    %v677 = vpack.c.b16 %v525, %v517
    %v678 = vpack.c.b16 %v526, %v518
    %v679 = vpack.c.b16 %v527, %v519
    %v680 = vpack.c.b16 %v528, %v520
    %v681 = vpack.c.b16 %v529, %v521
    %v682 = vpack.c.b16 %v530, %v522
    %v683 = vpack.c.b16 %v531, %v523
    %v684 = vpack.c.b16 %v532, %v524
    %v685 = vpack.c.b16 %v541, %v533
    %v686 = vpack.c.b16 %v542, %v534
    %v687 = vpack.c.b16 %v543, %v535
    %v688 = vpack.c.b16 %v544, %v536
    %v689 = vpack.c.b16 %v545, %v537
    %v690 = vpack.c.b16 %v546, %v538
    %v691 = vpack.c.b16 %v547, %v539
    %v692 = vpack.c.b16 %v548, %v540
    %v693 = vpack.c.b16 %v557, %v549
    %v694 = vpack.c.b16 %v558, %v550
    %v695 = vpack.c.b16 %v559, %v551
    %v696 = vpack.c.b16 %v560, %v552
    %v697 = vpack.c.b16 %v561, %v553
    %v698 = vpack.c.b16 %v562, %v554
    %v699 = vpack.c.b16 %v563, %v555
    %v700 = vpack.c.b16 %v564, %v556
    %v701 = vpack.c.b16 %v573, %v565
    %v702 = vpack.c.b16 %v574, %v566
    %v703 = vpack.c.b16 %v575, %v567
    %v704 = vpack.c.b16 %v576, %v568
    %v705 = vpack.c.b16 %v577, %v569
    %v706 = vpack.c.b16 %v578, %v570
    %v707 = vpack.c.b16 %v579, %v571
    %v708 = vpack.c.b16 %v580, %v572
    %837 = vmatprep.subr.bf16.mxu0 %v638
    %838 = vmatpush1.bf16.msra.mxu0 %v637
    %839 = vmatprep.subr.bf16.mxu0 %v630
    %840 = vmatpush1.bf16.msra.mxu0 %v629
    %841 = vmatprep.subr.bf16.mxu0 %v622
    %842 = vmatpush1.bf16.msra.mxu0 %v621
    %843 = vmatprep.subr.bf16.mxu0 %v614
    %844 = vmatpush1.bf16.msra.mxu0 %v613
    %845 = vmatprep.subr.bf16.mxu0 %v606
    %846 = vmatpush1.bf16.msra.mxu0 %v605
    %847 = vmatprep.subr.bf16.mxu0 %v598
    %848 = vmatpush1.bf16.msra.mxu0 %v597
    %849 = vmatprep.subr.bf16.mxu0 %v590
    %850 = vmatpush1.bf16.msra.mxu0 %v589
    %851 = vmatprep.subr.bf16.mxu0 %v582
    %852 = vmatpush1.bf16.msra.mxu0 %v581
    %853 = vmatprep.subr.bf16.mxu0 %v702
    %854 = vmatpush2.bf16.msra.mxu0 %v701
    %855 = vmatprep.subr.bf16.mxu0 %v694
    %856 = vmatpush2.bf16.msra.mxu0 %v693
    %857 = vmatprep.subr.bf16.mxu0 %v686
    %858 = vmatpush2.bf16.msra.mxu0 %v685
    %859 = vmatprep.subr.bf16.mxu0 %v678
    %860 = vmatpush2.bf16.msra.mxu0 %v677
    %861 = vmatprep.subr.bf16.mxu0 %v670
    %862 = vmatpush2.bf16.msra.mxu0 %v669
    %863 = vmatprep.subr.bf16.mxu0 %v662
    %864 = vmatpush2.bf16.msra.mxu0 %v661
    %865 = vmatprep.subr.bf16.mxu0 %v654
    %866 = vmatpush2.bf16.msra.mxu0 %v653
    %867 = vmatprep.subr.bf16.mxu0 %v646
    %868 = vmatpush2.bf16.msra.mxu0 %v645
    %869 = vmatprep.mubr.bf16.mxu0 %v194
    %870 = vmatmul.mubr.bf16.gmra.mxu0 %v193
    %v871 = vpop.f32.mrf.mxu0
    %v872 = vadd.f32 0.0, %v871
    %v873 = vpop.f32.mrf.mxu0
    %v874 = vadd.f32 0.0, %v873
    %v875 = vpop.f32.mrf.mxu0
    %v876 = vpop.f32.mrf.mxu0
    %877 = vdwg.mxu0
    %878 = vmatprep.subr.bf16.mxu0 %v640
    %879 = vmatpush1.bf16.msra.mxu0 %v639
    %880 = vmatprep.subr.bf16.mxu0 %v632
    %881 = vmatpush1.bf16.msra.mxu0 %v631
    %882 = vmatprep.subr.bf16.mxu0 %v624
    %883 = vmatpush1.bf16.msra.mxu0 %v623
    %884 = vmatprep.subr.bf16.mxu0 %v616
    %885 = vmatpush1.bf16.msra.mxu0 %v615
    %886 = vmatprep.subr.bf16.mxu0 %v608
    %887 = vmatpush1.bf16.msra.mxu0 %v607
    %888 = vmatprep.subr.bf16.mxu0 %v600
    %889 = vmatpush1.bf16.msra.mxu0 %v599
    %890 = vmatprep.subr.bf16.mxu0 %v592
    %891 = vmatpush1.bf16.msra.mxu0 %v591
    %892 = vmatprep.subr.bf16.mxu0 %v584
    %893 = vmatpush1.bf16.msra.mxu0 %v583
    %894 = vmatprep.subr.bf16.mxu0 %v704
    %895 = vmatpush2.bf16.msra.mxu0 %v703
    %896 = vmatprep.subr.bf16.mxu0 %v696
    %897 = vmatpush2.bf16.msra.mxu0 %v695
    %898 = vmatprep.subr.bf16.mxu0 %v688
    %899 = vmatpush2.bf16.msra.mxu0 %v687
    %900 = vmatprep.subr.bf16.mxu0 %v680
    %901 = vmatpush2.bf16.msra.mxu0 %v679
    %902 = vmatprep.subr.bf16.mxu0 %v672
    %903 = vmatpush2.bf16.msra.mxu0 %v671
    %904 = vmatprep.subr.bf16.mxu0 %v664
    %905 = vmatpush2.bf16.msra.mxu0 %v663
    %906 = vmatprep.subr.bf16.mxu0 %v656
    %907 = vmatpush2.bf16.msra.mxu0 %v655
    %908 = vmatprep.subr.bf16.mxu0 %v648
    %909 = vmatpush2.bf16.msra.mxu0 %v647
    %910 = vmatprep.mubr.bf16.mxu0 %v194
    %911 = vmatmul.mubr.bf16.gmra.mxu0 %v193
    %v912 = vpop.f32.mrf.mxu0
    %v913 = vadd.f32 0.0, %v912
    %v914 = vpop.f32.mrf.mxu0
    %v915 = vadd.f32 0.0, %v914
    %v916 = vpop.f32.mrf.mxu0
    %v917 = vpop.f32.mrf.mxu0
    %918 = vdwg.mxu0
    %919 = vmatprep.subr.bf16.mxu0 %v642
    %920 = vmatpush1.bf16.msra.mxu0 %v641
    %921 = vmatprep.subr.bf16.mxu0 %v634
    %922 = vmatpush1.bf16.msra.mxu0 %v633
    %923 = vmatprep.subr.bf16.mxu0 %v626
    %924 = vmatpush1.bf16.msra.mxu0 %v625
    %925 = vmatprep.subr.bf16.mxu0 %v618
    %926 = vmatpush1.bf16.msra.mxu0 %v617
    %927 = vmatprep.subr.bf16.mxu0 %v610
    %928 = vmatpush1.bf16.msra.mxu0 %v609
    %929 = vmatprep.subr.bf16.mxu0 %v602
    %930 = vmatpush1.bf16.msra.mxu0 %v601
    %931 = vmatprep.subr.bf16.mxu0 %v594
    %932 = vmatpush1.bf16.msra.mxu0 %v593
    %933 = vmatprep.subr.bf16.mxu0 %v586
    %934 = vmatpush1.bf16.msra.mxu0 %v585
    %935 = vmatprep.subr.bf16.mxu0 %v706
    %936 = vmatpush2.bf16.msra.mxu0 %v705
    %937 = vmatprep.subr.bf16.mxu0 %v698
    %938 = vmatpush2.bf16.msra.mxu0 %v697
    %939 = vmatprep.subr.bf16.mxu0 %v690
    %940 = vmatpush2.bf16.msra.mxu0 %v689
    %941 = vmatprep.subr.bf16.mxu0 %v682
    %942 = vmatpush2.bf16.msra.mxu0 %v681
    %943 = vmatprep.subr.bf16.mxu0 %v674
    %944 = vmatpush2.bf16.msra.mxu0 %v673
    %945 = vmatprep.subr.bf16.mxu0 %v666
    %946 = vmatpush2.bf16.msra.mxu0 %v665
    %947 = vmatprep.subr.bf16.mxu0 %v658
    %948 = vmatpush2.bf16.msra.mxu0 %v657
    %949 = vmatprep.subr.bf16.mxu0 %v650
    %950 = vmatpush2.bf16.msra.mxu0 %v649
    %951 = vmatprep.mubr.bf16.mxu0 %v194
    %952 = vmatmul.mubr.bf16.gmra.mxu0 %v193
    %v953 = vpop.f32.mrf.mxu0
    %v954 = vadd.f32 0.0, %v953
    %v955 = vpop.f32.mrf.mxu0
    %v956 = vadd.f32 0.0, %v955
    %v957 = vpop.f32.mrf.mxu0
    %v958 = vpop.f32.mrf.mxu0
    %959 = vdwg.mxu0
    %960 = vmatprep.subr.bf16.mxu0 %v644
    %961 = vmatpush1.bf16.msra.mxu0 %v643
    %962 = vmatprep.subr.bf16.mxu0 %v636
    %963 = vmatpush1.bf16.msra.mxu0 %v635
    %964 = vmatprep.subr.bf16.mxu0 %v628
    %965 = vmatpush1.bf16.msra.mxu0 %v627
    %966 = vmatprep.subr.bf16.mxu0 %v620
    %967 = vmatpush1.bf16.msra.mxu0 %v619
    %968 = vmatprep.subr.bf16.mxu0 %v612
    %969 = vmatpush1.bf16.msra.mxu0 %v611
    %970 = vmatprep.subr.bf16.mxu0 %v604
    %971 = vmatpush1.bf16.msra.mxu0 %v603
    %972 = vmatprep.subr.bf16.mxu0 %v596
    %973 = vmatpush1.bf16.msra.mxu0 %v595
    %974 = vmatprep.subr.bf16.mxu0 %v588
    %975 = vmatpush1.bf16.msra.mxu0 %v587
    %976 = vmatprep.subr.bf16.mxu0 %v708
    %977 = vmatpush2.bf16.msra.mxu0 %v707
    %978 = vmatprep.subr.bf16.mxu0 %v700
    %979 = vmatpush2.bf16.msra.mxu0 %v699
    %980 = vmatprep.subr.bf16.mxu0 %v692
    %981 = vmatpush2.bf16.msra.mxu0 %v691
    %982 = vmatprep.subr.bf16.mxu0 %v684
    %983 = vmatpush2.bf16.msra.mxu0 %v683
    %984 = vmatprep.subr.bf16.mxu0 %v676
    %985 = vmatpush2.bf16.msra.mxu0 %v675
    %986 = vmatprep.subr.bf16.mxu0 %v668
    %987 = vmatpush2.bf16.msra.mxu0 %v667
    %988 = vmatprep.subr.bf16.mxu0 %v660
    %989 = vmatpush2.bf16.msra.mxu0 %v659
    %990 = vmatprep.subr.bf16.mxu0 %v652
    %991 = vmatpush2.bf16.msra.mxu0 %v651
    %992 = vmatprep.mubr.bf16.mxu0 %v194
    %993 = vmatmul.mubr.bf16.gmra.mxu0 %v193
    %v994 = vpop.f32.mrf.mxu0
    %v995 = vadd.f32 0.0, %v994
    %v996 = vpop.f32.mrf.mxu0
    %v997 = vadd.f32 0.0, %v996
    %v998 = vpop.f32.mrf.mxu0
    %v999 = vpop.f32.mrf.mxu0
    %1000 = vdwg.mxu0
    %v1001 = vmax.f32 %v872, %v913
    %v1002 = vmax.f32 %v874, %v915
    %v1003 = vmax.f32 %v954, %v995
    %v1004 = vmax.f32 %v956, %v997
    %v1005 = vmax.f32 %v1001, %v1003
    %v1006 = vmax.f32 %v1002, %v1004
    %v1007 = vld [vmem:[%s2] sm:$0x3]
    %v1009 = vlaneseq
    %v1010 = vshrl.u32 %v1009, 7
    %v1011 = vsub.s32 0, %v1010
    %v1012 = vrot.slane %v1007, %v1011
    %v1013 = vlaneseq
    %v1014 = vshrl.u32 %v1013, 7
    %v1015 = vsub.s32 1, %v1014
    %v1016 = vrot.slane %v1007, %v1015
    %v1019 = vadd.f32 %v1005, %v1012
    %v1020 = vadd.f32 %v1006, %v1016
    %v1021 = vmax.f32 %v1019, 0.0
    %v1022 = vmax.f32 %v1020, 0.0
    %v1023 = vpack.c.bf16 %v1021, %v1021
    %v1024 = vpack.c.bf16 %v1022, %v1022
    %v1025 = vld [vmem:[#allocation4] sm:$0xff]
    %v1026 = vld [vmem:[#allocation4 + $0x8] sm:$0xff]
    %v1027 = vld [vmem:[#allocation4 + $0x10] sm:$0xff]
    %v1028 = vld [vmem:[#allocation4 + $0x18] sm:$0xff]
    %v1029 = vld [vmem:[#allocation4 + $0x20] sm:$0xff]
    %v1030 = vld [vmem:[#allocation4 + $0x28] sm:$0xff]
    %v1031 = vld [vmem:[#allocation4 + $0x30] sm:$0xff]
    %v1032 = vld [vmem:[#allocation4 + $0x38] sm:$0xff]
    %v1033 = vld [vmem:[#allocation4 + $0x40] sm:$0xff]
    %v1034 = vld [vmem:[#allocation4 + $0x48] sm:$0xff]
    %v1035 = vld [vmem:[#allocation4 + $0x50] sm:$0xff]
    %v1036 = vld [vmem:[#allocation4 + $0x58] sm:$0xff]
    %v1037 = vld [vmem:[#allocation4 + $0x60] sm:$0xff]
    %v1038 = vld [vmem:[#allocation4 + $0x68] sm:$0xff]
    %v1039 = vld [vmem:[#allocation4 + $0x70] sm:$0xff]
    %v1040 = vld [vmem:[#allocation4 + $0x78] sm:$0xff]
    %v1041 = vld [vmem:[#allocation4 + $0x80] sm:$0xff]
    %v1042 = vld [vmem:[#allocation4 + $0x88] sm:$0xff]
    %v1043 = vld [vmem:[#allocation4 + $0x90] sm:$0xff]
    %v1044 = vld [vmem:[#allocation4 + $0x98] sm:$0xff]
    %v1045 = vld [vmem:[#allocation4 + $0xa0] sm:$0xff]
    %v1046 = vld [vmem:[#allocation4 + $0xa8] sm:$0xff]
    %v1047 = vld [vmem:[#allocation4 + $0xb0] sm:$0xff]
    %v1048 = vld [vmem:[#allocation4 + $0xb8] sm:$0xff]
    %v1049 = vld [vmem:[#allocation4 + $0xc0] sm:$0xff]
    %v1050 = vld [vmem:[#allocation4 + $0xc8] sm:$0xff]
    %v1051 = vld [vmem:[#allocation4 + $0xd0] sm:$0xff]
    %v1052 = vld [vmem:[#allocation4 + $0xd8] sm:$0xff]
    %v1053 = vld [vmem:[#allocation4 + $0xe0] sm:$0xff]
    %v1054 = vld [vmem:[#allocation4 + $0xe8] sm:$0xff]
    %v1055 = vld [vmem:[#allocation4 + $0xf0] sm:$0xff]
    %v1056 = vld [vmem:[#allocation4 + $0xf8] sm:$0xff]
    %v1057 = vld [vmem:[#allocation4 + $0x100] sm:$0xff]
    %v1058 = vld [vmem:[#allocation4 + $0x108] sm:$0xff]
    %v1059 = vld [vmem:[#allocation4 + $0x110] sm:$0xff]
    %v1060 = vld [vmem:[#allocation4 + $0x118] sm:$0xff]
    %v1061 = vld [vmem:[#allocation4 + $0x120] sm:$0xff]
    %v1062 = vld [vmem:[#allocation4 + $0x128] sm:$0xff]
    %v1063 = vld [vmem:[#allocation4 + $0x130] sm:$0xff]
    %v1064 = vld [vmem:[#allocation4 + $0x138] sm:$0xff]
    %v1065 = vld [vmem:[#allocation4 + $0x140] sm:$0xff]
    %v1066 = vld [vmem:[#allocation4 + $0x148] sm:$0xff]
    %v1067 = vld [vmem:[#allocation4 + $0x150] sm:$0xff]
    %v1068 = vld [vmem:[#allocation4 + $0x158] sm:$0xff]
    %v1069 = vld [vmem:[#allocation4 + $0x160] sm:$0xff]
    %v1070 = vld [vmem:[#allocation4 + $0x168] sm:$0xff]
    %v1071 = vld [vmem:[#allocation4 + $0x170] sm:$0xff]
    %v1072 = vld [vmem:[#allocation4 + $0x178] sm:$0xff]
    %v1073 = vld [vmem:[#allocation4 + $0x180] sm:$0xff]
    %v1074 = vld [vmem:[#allocation4 + $0x188] sm:$0xff]
    %v1075 = vld [vmem:[#allocation4 + $0x190] sm:$0xff]
    %v1076 = vld [vmem:[#allocation4 + $0x198] sm:$0xff]
    %v1077 = vld [vmem:[#allocation4 + $0x1a0] sm:$0xff]
    %v1078 = vld [vmem:[#allocation4 + $0x1a8] sm:$0xff]
    %v1079 = vld [vmem:[#allocation4 + $0x1b0] sm:$0xff]
    %v1080 = vld [vmem:[#allocation4 + $0x1b8] sm:$0xff]
    %v1081 = vld [vmem:[#allocation4 + $0x1c0] sm:$0xff]
    %v1082 = vld [vmem:[#allocation4 + $0x1c8] sm:$0xff]
    %v1083 = vld [vmem:[#allocation4 + $0x1d0] sm:$0xff]
    %v1084 = vld [vmem:[#allocation4 + $0x1d8] sm:$0xff]
    %v1085 = vld [vmem:[#allocation4 + $0x1e0] sm:$0xff]
    %v1086 = vld [vmem:[#allocation4 + $0x1e8] sm:$0xff]
    %v1087 = vld [vmem:[#allocation4 + $0x1f0] sm:$0xff]
    %v1088 = vld [vmem:[#allocation4 + $0x1f8] sm:$0xff]
    %v1153 = vunpack.c.l.b16 %v1025
    %v1154 = vunpack.c.h.b16 %v1025
    %v1155 = vunpack.c.l.b16 %v1026
    %v1156 = vunpack.c.h.b16 %v1026
    %v1157 = vunpack.c.l.b16 %v1027
    %v1158 = vunpack.c.h.b16 %v1027
    %v1159 = vunpack.c.l.b16 %v1028
    %v1160 = vunpack.c.h.b16 %v1028
    %v1161 = vunpack.c.l.b16 %v1029
    %v1162 = vunpack.c.h.b16 %v1029
    %v1163 = vunpack.c.l.b16 %v1030
    %v1164 = vunpack.c.h.b16 %v1030
    %v1165 = vunpack.c.l.b16 %v1031
    %v1166 = vunpack.c.h.b16 %v1031
    %v1167 = vunpack.c.l.b16 %v1032
    %v1168 = vunpack.c.h.b16 %v1032
    %v1169 = vunpack.c.l.b16 %v1033
    %v1170 = vunpack.c.h.b16 %v1033
    %v1171 = vunpack.c.l.b16 %v1034
    %v1172 = vunpack.c.h.b16 %v1034
    %v1173 = vunpack.c.l.b16 %v1035
    %v1174 = vunpack.c.h.b16 %v1035
    %v1175 = vunpack.c.l.b16 %v1036
    %v1176 = vunpack.c.h.b16 %v1036
    %v1177 = vunpack.c.l.b16 %v1037
    %v1178 = vunpack.c.h.b16 %v1037
    %v1179 = vunpack.c.l.b16 %v1038
    %v1180 = vunpack.c.h.b16 %v1038
    %v1181 = vunpack.c.l.b16 %v1039
    %v1182 = vunpack.c.h.b16 %v1039
    %v1183 = vunpack.c.l.b16 %v1040
    %v1184 = vunpack.c.h.b16 %v1040
    %v1185 = vunpack.c.l.b16 %v1041
    %v1186 = vunpack.c.h.b16 %v1041
    %v1187 = vunpack.c.l.b16 %v1042
    %v1188 = vunpack.c.h.b16 %v1042
    %v1189 = vunpack.c.l.b16 %v1043
    %v1190 = vunpack.c.h.b16 %v1043
    %v1191 = vunpack.c.l.b16 %v1044
    %v1192 = vunpack.c.h.b16 %v1044
    %v1193 = vunpack.c.l.b16 %v1045
    %v1194 = vunpack.c.h.b16 %v1045
    %v1195 = vunpack.c.l.b16 %v1046
    %v1196 = vunpack.c.h.b16 %v1046
    %v1197 = vunpack.c.l.b16 %v1047
    %v1198 = vunpack.c.h.b16 %v1047
    %v1199 = vunpack.c.l.b16 %v1048
    %v1200 = vunpack.c.h.b16 %v1048
    %v1201 = vunpack.c.l.b16 %v1049
    %v1202 = vunpack.c.h.b16 %v1049
    %v1203 = vunpack.c.l.b16 %v1050
    %v1204 = vunpack.c.h.b16 %v1050
    %v1205 = vunpack.c.l.b16 %v1051
    %v1206 = vunpack.c.h.b16 %v1051
    %v1207 = vunpack.c.l.b16 %v1052
    %v1208 = vunpack.c.h.b16 %v1052
    %v1209 = vunpack.c.l.b16 %v1053
    %v1210 = vunpack.c.h.b16 %v1053
    %v1211 = vunpack.c.l.b16 %v1054
    %v1212 = vunpack.c.h.b16 %v1054
    %v1213 = vunpack.c.l.b16 %v1055
    %v1214 = vunpack.c.h.b16 %v1055
    %v1215 = vunpack.c.l.b16 %v1056
    %v1216 = vunpack.c.h.b16 %v1056
    %v1217 = vunpack.c.l.b16 %v1057
    %v1218 = vunpack.c.h.b16 %v1057
    %v1219 = vunpack.c.l.b16 %v1058
    %v1220 = vunpack.c.h.b16 %v1058
    %v1221 = vunpack.c.l.b16 %v1059
    %v1222 = vunpack.c.h.b16 %v1059
    %v1223 = vunpack.c.l.b16 %v1060
    %v1224 = vunpack.c.h.b16 %v1060
    %v1225 = vunpack.c.l.b16 %v1061
    %v1226 = vunpack.c.h.b16 %v1061
    %v1227 = vunpack.c.l.b16 %v1062
    %v1228 = vunpack.c.h.b16 %v1062
    %v1229 = vunpack.c.l.b16 %v1063
    %v1230 = vunpack.c.h.b16 %v1063
    %v1231 = vunpack.c.l.b16 %v1064
    %v1232 = vunpack.c.h.b16 %v1064
    %v1233 = vunpack.c.l.b16 %v1065
    %v1234 = vunpack.c.h.b16 %v1065
    %v1235 = vunpack.c.l.b16 %v1066
    %v1236 = vunpack.c.h.b16 %v1066
    %v1237 = vunpack.c.l.b16 %v1067
    %v1238 = vunpack.c.h.b16 %v1067
    %v1239 = vunpack.c.l.b16 %v1068
    %v1240 = vunpack.c.h.b16 %v1068
    %v1241 = vunpack.c.l.b16 %v1069
    %v1242 = vunpack.c.h.b16 %v1069
    %v1243 = vunpack.c.l.b16 %v1070
    %v1244 = vunpack.c.h.b16 %v1070
    %v1245 = vunpack.c.l.b16 %v1071
    %v1246 = vunpack.c.h.b16 %v1071
    %v1247 = vunpack.c.l.b16 %v1072
    %v1248 = vunpack.c.h.b16 %v1072
    %v1249 = vunpack.c.l.b16 %v1073
    %v1250 = vunpack.c.h.b16 %v1073
    %v1251 = vunpack.c.l.b16 %v1074
    %v1252 = vunpack.c.h.b16 %v1074
    %v1253 = vunpack.c.l.b16 %v1075
    %v1254 = vunpack.c.h.b16 %v1075
    %v1255 = vunpack.c.l.b16 %v1076
    %v1256 = vunpack.c.h.b16 %v1076
    %v1257 = vunpack.c.l.b16 %v1077
    %v1258 = vunpack.c.h.b16 %v1077
    %v1259 = vunpack.c.l.b16 %v1078
    %v1260 = vunpack.c.h.b16 %v1078
    %v1261 = vunpack.c.l.b16 %v1079
    %v1262 = vunpack.c.h.b16 %v1079
    %v1263 = vunpack.c.l.b16 %v1080
    %v1264 = vunpack.c.h.b16 %v1080
    %v1265 = vunpack.c.l.b16 %v1081
    %v1266 = vunpack.c.h.b16 %v1081
    %v1267 = vunpack.c.l.b16 %v1082
    %v1268 = vunpack.c.h.b16 %v1082
    %v1269 = vunpack.c.l.b16 %v1083
    %v1270 = vunpack.c.h.b16 %v1083
    %v1271 = vunpack.c.l.b16 %v1084
    %v1272 = vunpack.c.h.b16 %v1084
    %v1273 = vunpack.c.l.b16 %v1085
    %v1274 = vunpack.c.h.b16 %v1085
    %v1275 = vunpack.c.l.b16 %v1086
    %v1276 = vunpack.c.h.b16 %v1086
    %v1277 = vunpack.c.l.b16 %v1087
    %v1278 = vunpack.c.h.b16 %v1087
    %v1279 = vunpack.c.l.b16 %v1088
    %v1280 = vunpack.c.h.b16 %v1088
    %v1281 = vpack.c.b16 %v1157, %v1153
    %v1282 = vpack.c.b16 %v1158, %v1154
    %v1283 = vpack.c.b16 %v1159, %v1155
    %v1284 = vpack.c.b16 %v1160, %v1156
    %v1285 = vpack.c.b16 %v1165, %v1161
    %v1286 = vpack.c.b16 %v1166, %v1162
    %v1287 = vpack.c.b16 %v1167, %v1163
    %v1288 = vpack.c.b16 %v1168, %v1164
    %v1289 = vpack.c.b16 %v1173, %v1169
    %v1290 = vpack.c.b16 %v1174, %v1170
    %v1291 = vpack.c.b16 %v1175, %v1171
    %v1292 = vpack.c.b16 %v1176, %v1172
    %v1293 = vpack.c.b16 %v1181, %v1177
    %v1294 = vpack.c.b16 %v1182, %v1178
    %v1295 = vpack.c.b16 %v1183, %v1179
    %v1296 = vpack.c.b16 %v1184, %v1180
    %v1297 = vpack.c.b16 %v1189, %v1185
    %v1298 = vpack.c.b16 %v1190, %v1186
    %v1299 = vpack.c.b16 %v1191, %v1187
    %v1300 = vpack.c.b16 %v1192, %v1188
    %v1301 = vpack.c.b16 %v1197, %v1193
    %v1302 = vpack.c.b16 %v1198, %v1194
    %v1303 = vpack.c.b16 %v1199, %v1195
    %v1304 = vpack.c.b16 %v1200, %v1196
    %v1305 = vpack.c.b16 %v1205, %v1201
    %v1306 = vpack.c.b16 %v1206, %v1202
    %v1307 = vpack.c.b16 %v1207, %v1203
    %v1308 = vpack.c.b16 %v1208, %v1204
    %v1309 = vpack.c.b16 %v1213, %v1209
    %v1310 = vpack.c.b16 %v1214, %v1210
    %v1311 = vpack.c.b16 %v1215, %v1211
    %v1312 = vpack.c.b16 %v1216, %v1212
    %v1313 = vpack.c.b16 %v1221, %v1217
    %v1314 = vpack.c.b16 %v1222, %v1218
    %v1315 = vpack.c.b16 %v1223, %v1219
    %v1316 = vpack.c.b16 %v1224, %v1220
    %v1317 = vpack.c.b16 %v1229, %v1225
    %v1318 = vpack.c.b16 %v1230, %v1226
    %v1319 = vpack.c.b16 %v1231, %v1227
    %v1320 = vpack.c.b16 %v1232, %v1228
    %v1321 = vpack.c.b16 %v1237, %v1233
    %v1322 = vpack.c.b16 %v1238, %v1234
    %v1323 = vpack.c.b16 %v1239, %v1235
    %v1324 = vpack.c.b16 %v1240, %v1236
    %v1325 = vpack.c.b16 %v1245, %v1241
    %v1326 = vpack.c.b16 %v1246, %v1242
    %v1327 = vpack.c.b16 %v1247, %v1243
    %v1328 = vpack.c.b16 %v1248, %v1244
    %v1329 = vpack.c.b16 %v1253, %v1249
    %v1330 = vpack.c.b16 %v1254, %v1250
    %v1331 = vpack.c.b16 %v1255, %v1251
    %v1332 = vpack.c.b16 %v1256, %v1252
    %v1333 = vpack.c.b16 %v1261, %v1257
    %v1334 = vpack.c.b16 %v1262, %v1258
    %v1335 = vpack.c.b16 %v1263, %v1259
    %v1336 = vpack.c.b16 %v1264, %v1260
    %v1337 = vpack.c.b16 %v1269, %v1265
    %v1338 = vpack.c.b16 %v1270, %v1266
    %v1339 = vpack.c.b16 %v1271, %v1267
    %v1340 = vpack.c.b16 %v1272, %v1268
    %v1341 = vpack.c.b16 %v1277, %v1273
    %v1342 = vpack.c.b16 %v1278, %v1274
    %v1343 = vpack.c.b16 %v1279, %v1275
    %v1344 = vpack.c.b16 %v1280, %v1276
    %1409 = vmatprep.subr.bf16.mxu0 %v1310
    %1410 = vmatpush1.bf16.msra.mxu0 %v1309
    %1411 = vmatprep.subr.bf16.mxu0 %v1306
    %1412 = vmatpush1.bf16.msra.mxu0 %v1305
    %1413 = vmatprep.subr.bf16.mxu0 %v1302
    %1414 = vmatpush1.bf16.msra.mxu0 %v1301
    %1415 = vmatprep.subr.bf16.mxu0 %v1298
    %1416 = vmatpush1.bf16.msra.mxu0 %v1297
    %1417 = vmatprep.subr.bf16.mxu0 %v1294
    %1418 = vmatpush1.bf16.msra.mxu0 %v1293
    %1419 = vmatprep.subr.bf16.mxu0 %v1290
    %1420 = vmatpush1.bf16.msra.mxu0 %v1289
    %1421 = vmatprep.subr.bf16.mxu0 %v1286
    %1422 = vmatpush1.bf16.msra.mxu0 %v1285
    %1423 = vmatprep.subr.bf16.mxu0 %v1282
    %1424 = vmatpush1.bf16.msra.mxu0 %v1281
    %1425 = vmatprep.subr.bf16.mxu0 %v1342
    %1426 = vmatpush2.bf16.msra.mxu0 %v1341
    %1427 = vmatprep.subr.bf16.mxu0 %v1338
    %1428 = vmatpush2.bf16.msra.mxu0 %v1337
    %1429 = vmatprep.subr.bf16.mxu0 %v1334
    %1430 = vmatpush2.bf16.msra.mxu0 %v1333
    %1431 = vmatprep.subr.bf16.mxu0 %v1330
    %1432 = vmatpush2.bf16.msra.mxu0 %v1329
    %1433 = vmatprep.subr.bf16.mxu0 %v1326
    %1434 = vmatpush2.bf16.msra.mxu0 %v1325
    %1435 = vmatprep.subr.bf16.mxu0 %v1322
    %1436 = vmatpush2.bf16.msra.mxu0 %v1321
    %1437 = vmatprep.subr.bf16.mxu0 %v1318
    %1438 = vmatpush2.bf16.msra.mxu0 %v1317
    %1439 = vmatprep.subr.bf16.mxu0 %v1314
    %1440 = vmatpush2.bf16.msra.mxu0 %v1313
    %1441 = vmatprep.mubr.bf16.mxu0 %v1024
    %1442 = vmatmul.mubr.bf16.gmra.mxu0 %v1023
    %v1443 = vpop.f32.mrf.mxu0
    %v1444 = vadd.f32 0.0, %v1443
    %v1445 = vpop.f32.mrf.mxu0
    %v1446 = vadd.f32 0.0, %v1445
    %v1447 = vpop.f32.mrf.mxu0
    %v1448 = vpop.f32.mrf.mxu0
    %1449 = vdwg.mxu0
    %1450 = vmatprep.subr.bf16.mxu0 %v1312
    %1451 = vmatpush1.bf16.msra.mxu0 %v1311
    %1452 = vmatprep.subr.bf16.mxu0 %v1308
    %1453 = vmatpush1.bf16.msra.mxu0 %v1307
    %1454 = vmatprep.subr.bf16.mxu0 %v1304
    %1455 = vmatpush1.bf16.msra.mxu0 %v1303
    %1456 = vmatprep.subr.bf16.mxu0 %v1300
    %1457 = vmatpush1.bf16.msra.mxu0 %v1299
    %1458 = vmatprep.subr.bf16.mxu0 %v1296
    %1459 = vmatpush1.bf16.msra.mxu0 %v1295
    %1460 = vmatprep.subr.bf16.mxu0 %v1292
    %1461 = vmatpush1.bf16.msra.mxu0 %v1291
    %1462 = vmatprep.subr.bf16.mxu0 %v1288
    %1463 = vmatpush1.bf16.msra.mxu0 %v1287
    %1464 = vmatprep.subr.bf16.mxu0 %v1284
    %1465 = vmatpush1.bf16.msra.mxu0 %v1283
    %1466 = vmatprep.subr.bf16.mxu0 %v1344
    %1467 = vmatpush2.bf16.msra.mxu0 %v1343
    %1468 = vmatprep.subr.bf16.mxu0 %v1340
    %1469 = vmatpush2.bf16.msra.mxu0 %v1339
    %1470 = vmatprep.subr.bf16.mxu0 %v1336
    %1471 = vmatpush2.bf16.msra.mxu0 %v1335
    %1472 = vmatprep.subr.bf16.mxu0 %v1332
    %1473 = vmatpush2.bf16.msra.mxu0 %v1331
    %1474 = vmatprep.subr.bf16.mxu0 %v1328
    %1475 = vmatpush2.bf16.msra.mxu0 %v1327
    %1476 = vmatprep.subr.bf16.mxu0 %v1324
    %1477 = vmatpush2.bf16.msra.mxu0 %v1323
    %1478 = vmatprep.subr.bf16.mxu0 %v1320
    %1479 = vmatpush2.bf16.msra.mxu0 %v1319
    %1480 = vmatprep.subr.bf16.mxu0 %v1316
    %1481 = vmatpush2.bf16.msra.mxu0 %v1315
    %1482 = vmatprep.mubr.bf16.mxu0 %v1024
    %1483 = vmatmul.mubr.bf16.gmra.mxu0 %v1023
    %v1484 = vpop.f32.mrf.mxu0
    %v1485 = vadd.f32 0.0, %v1484
    %v1486 = vpop.f32.mrf.mxu0
    %v1487 = vadd.f32 0.0, %v1486
    %v1488 = vpop.f32.mrf.mxu0
    %v1489 = vpop.f32.mrf.mxu0
    %1490 = vdwg.mxu0
    %v1491 = vmax.f32 %v1444, %v1446
    %v1492 = vmax.f32 %v1485, %v1487
    %v1493 = vmax.f32 %v1491, %v1492
    %v1494 = vld [vmem:[%s4] sm:$0x1]
    %v1496 = vlaneseq
    %v1497 = vshrl.u32 %v1496, 7
    %v1498 = vsub.s32 0, %v1497
    %v1499 = vrot.slane %v1494, %v1498
    %v1501 = vadd.f32 %v1493, %v1499
    %v1502 = vmax.f32 %v1501, 0.0
    %v1503 = vpack.c.bf16 %v1502, %v1502
    %v1504 = vld [vmem:[%s5] sm:$0xf]
    %v1505 = vld [vmem:[%s5 + $0x4] sm:$0xf]
    %v1506 = vld [vmem:[%s5 + $0x8] sm:$0xf]
    %v1507 = vld [vmem:[%s5 + $0xc] sm:$0xf]
    %v1508 = vld [vmem:[%s5 + $0x10] sm:$0xf]
    %v1509 = vld [vmem:[%s5 + $0x14] sm:$0xf]
    %v1510 = vld [vmem:[%s5 + $0x18] sm:$0xf]
    %v1511 = vld [vmem:[%s5 + $0x1c] sm:$0xf]
    %v1512 = vld [vmem:[%s5 + $0x20] sm:$0xf]
    %v1513 = vld [vmem:[%s5 + $0x24] sm:$0xf]
    %v1514 = vld [vmem:[%s5 + $0x28] sm:$0xf]
    %v1515 = vld [vmem:[%s5 + $0x2c] sm:$0xf]
    %v1516 = vld [vmem:[%s5 + $0x30] sm:$0xf]
    %v1517 = vld [vmem:[%s5 + $0x34] sm:$0xf]
    %v1518 = vld [vmem:[%s5 + $0x38] sm:$0xf]
    %v1519 = vld [vmem:[%s5 + $0x3c] sm:$0xf]
    %v1520 = vld [vmem:[%s6] sm:$0x1]
    %v1522 = vlaneseq
    %v1523 = vshrl.u32 %v1522, 7
    %v1524 = vsub.s32 0, %v1523
    %v1525 = vrot.slane %v1520, %v1524
    %v1543 = vunpack.c.l.b16 %v1504
    %v1544 = vunpack.c.l.b16 %v1505
    %v1545 = vunpack.c.l.b16 %v1506
    %v1546 = vunpack.c.l.b16 %v1507
    %v1547 = vunpack.c.l.b16 %v1508
    %v1548 = vunpack.c.l.b16 %v1509
    %v1549 = vunpack.c.l.b16 %v1510
    %v1550 = vunpack.c.l.b16 %v1511
    %v1551 = vunpack.c.l.b16 %v1512
    %v1552 = vunpack.c.l.b16 %v1513
    %v1553 = vunpack.c.l.b16 %v1514
    %v1554 = vunpack.c.l.b16 %v1515
    %v1555 = vunpack.c.l.b16 %v1516
    %v1556 = vunpack.c.l.b16 %v1517
    %v1557 = vunpack.c.l.b16 %v1518
    %v1558 = vunpack.c.l.b16 %v1519
    %v1559 = vpack.c.b16 %v1544, %v1543
    %v1560 = vpack.c.b16 %v1546, %v1545
    %v1561 = vpack.c.b16 %v1548, %v1547
    %v1562 = vpack.c.b16 %v1550, %v1549
    %v1563 = vpack.c.b16 %v1552, %v1551
    %v1564 = vpack.c.b16 %v1554, %v1553
    %v1565 = vpack.c.b16 %v1556, %v1555
    %v1566 = vpack.c.b16 %v1558, %v1557
    %1575 = vmatprep.subr.bf16.mxu0 0
    %1576 = vmatpush1.bf16.msra.mxu0 %v1566
    %1577 = vmatprep.subr.bf16.mxu0 0
    %1578 = vmatpush1.bf16.msra.mxu0 %v1565
    %1579 = vmatprep.subr.bf16.mxu0 0
    %1580 = vmatpush1.bf16.msra.mxu0 %v1564
    %1581 = vmatprep.subr.bf16.mxu0 0
    %1582 = vmatpush1.bf16.msra.mxu0 %v1563
    %1583 = vmatprep.subr.bf16.mxu0 0
    %1584 = vmatpush1.bf16.msra.mxu0 %v1562
    %1585 = vmatprep.subr.bf16.mxu0 0
    %1586 = vmatpush1.bf16.msra.mxu0 %v1561
    %1587 = vmatprep.subr.bf16.mxu0 0
    %1588 = vmatpush1.bf16.msra.mxu0 %v1560
    %1589 = vmatprep.subr.bf16.mxu0 0
    %1590 = vmatpush1.bf16.msra.mxu0 %v1559
    %1591 = vmatprep.subr.bf16.mxu0 0
    %1592 = vmatpush2.bf16.msra.mxu0 0
    %1593 = vmatprep.subr.bf16.mxu0 0
    %1594 = vmatpush2.bf16.msra.mxu0 0
    %1595 = vmatprep.subr.bf16.mxu0 0
    %1596 = vmatpush2.bf16.msra.mxu0 0
    %1597 = vmatprep.subr.bf16.mxu0 0
    %1598 = vmatpush2.bf16.msra.mxu0 0
    %1599 = vmatprep.subr.bf16.mxu0 0
    %1600 = vmatpush2.bf16.msra.mxu0 0
    %1601 = vmatprep.subr.bf16.mxu0 0
    %1602 = vmatpush2.bf16.msra.mxu0 0
    %1603 = vmatprep.subr.bf16.mxu0 0
    %1604 = vmatpush2.bf16.msra.mxu0 0
    %1605 = vmatprep.subr.bf16.mxu0 0
    %1606 = vmatpush2.bf16.msra.mxu0 0
    %1607 = vmatprep.mubr.bf16.mxu0 0
    %1608 = vmatmul.mubr.bf16.gmra.mxu0 %v1503
    %v1609 = vpop.f32.mrf.mxu0
    %v1610 = vadd.f32 %v1525, %v1609
    %v1611 = vpop.f32.mrf.mxu0
    %v1612 = vpop.f32.mrf.mxu0
    %v1613 = vpop.f32.mrf.mxu0
    %1614 = vdwg.mxu0
    %v1615 = vmax.f32 %v1610, 0.0
    %v1616 = vpack.c.bf16 %v1615, %v1615
    %v1617 = vld [vmem:[%s7] sm:$0xf]
    %v1618 = vld [vmem:[%s7 + $0x4] sm:$0xf]
    %v1619 = vld [vmem:[%s7 + $0x8] sm:$0xf]
    %v1620 = vld [vmem:[%s7 + $0xc] sm:$0xf]
    %v1621 = vld [vmem:[%s7 + $0x10] sm:$0xf]
    %v1622 = vld [vmem:[%s7 + $0x14] sm:$0xf]
    %v1623 = vld [vmem:[%s7 + $0x18] sm:$0xf]
    %v1624 = vld [vmem:[%s7 + $0x1c] sm:$0xf]
    %v1625 = vld [vmem:[%s7 + $0x20] sm:$0xf]
    %v1626 = vld [vmem:[%s7 + $0x24] sm:$0xf]
    %v1627 = vld [vmem:[%s7 + $0x28] sm:$0xf]
    %v1628 = vld [vmem:[%s7 + $0x2c] sm:$0xf]
    %v1629 = vld [vmem:[%s7 + $0x30] sm:$0xf]
    %v1630 = vld [vmem:[%s7 + $0x34] sm:$0xf]
    %v1631 = vld [vmem:[%s7 + $0x38] sm:$0xf]
    %v1632 = vld [vmem:[%s7 + $0x3c] sm:$0xf]
    %v1633 = vld [vmem:[%s8] sm:$0x1]
    %v1635 = vlaneseq
    %v1636 = vshrl.u32 %v1635, 7
    %v1637 = vsub.s32 0, %v1636
    %v1638 = vrot.slane %v1633, %v1637
    %v1656 = vunpack.c.l.b16 %v1617
    %v1657 = vunpack.c.l.b16 %v1618
    %v1658 = vunpack.c.l.b16 %v1619
    %v1659 = vunpack.c.l.b16 %v1620
    %v1660 = vunpack.c.l.b16 %v1621
    %v1661 = vunpack.c.l.b16 %v1622
    %v1662 = vunpack.c.l.b16 %v1623
    %v1663 = vunpack.c.l.b16 %v1624
    %v1664 = vunpack.c.l.b16 %v1625
    %v1665 = vunpack.c.l.b16 %v1626
    %v1666 = vunpack.c.l.b16 %v1627
    %v1667 = vunpack.c.l.b16 %v1628
    %v1668 = vunpack.c.l.b16 %v1629
    %v1669 = vunpack.c.l.b16 %v1630
    %v1670 = vunpack.c.l.b16 %v1631
    %v1671 = vunpack.c.l.b16 %v1632
    %v1672 = vpack.c.b16 %v1657, %v1656
    %v1673 = vpack.c.b16 %v1659, %v1658
    %v1674 = vpack.c.b16 %v1661, %v1660
    %v1675 = vpack.c.b16 %v1663, %v1662
    %v1676 = vpack.c.b16 %v1665, %v1664
    %v1677 = vpack.c.b16 %v1667, %v1666
    %v1678 = vpack.c.b16 %v1669, %v1668
    %v1679 = vpack.c.b16 %v1671, %v1670
    %1688 = vmatprep.subr.bf16.mxu0 0
    %1689 = vmatpush1.bf16.msra.mxu0 %v1679
    %1690 = vmatprep.subr.bf16.mxu0 0
    %1691 = vmatpush1.bf16.msra.mxu0 %v1678
    %1692 = vmatprep.subr.bf16.mxu0 0
    %1693 = vmatpush1.bf16.msra.mxu0 %v1677
    %1694 = vmatprep.subr.bf16.mxu0 0
    %1695 = vmatpush1.bf16.msra.mxu0 %v1676
    %1696 = vmatprep.subr.bf16.mxu0 0
    %1697 = vmatpush1.bf16.msra.mxu0 %v1675
    %1698 = vmatprep.subr.bf16.mxu0 0
    %1699 = vmatpush1.bf16.msra.mxu0 %v1674
    %1700 = vmatprep.subr.bf16.mxu0 0
    %1701 = vmatpush1.bf16.msra.mxu0 %v1673
    %1702 = vmatprep.subr.bf16.mxu0 0
    %1703 = vmatpush1.bf16.msra.mxu0 %v1672
    %1704 = vmatprep.subr.bf16.mxu0 0
    %1705 = vmatpush2.bf16.msra.mxu0 0
    %1706 = vmatprep.subr.bf16.mxu0 0
    %1707 = vmatpush2.bf16.msra.mxu0 0
    %1708 = vmatprep.subr.bf16.mxu0 0
    %1709 = vmatpush2.bf16.msra.mxu0 0
    %1710 = vmatprep.subr.bf16.mxu0 0
    %1711 = vmatpush2.bf16.msra.mxu0 0
    %1712 = vmatprep.subr.bf16.mxu0 0
    %1713 = vmatpush2.bf16.msra.mxu0 0
    %1714 = vmatprep.subr.bf16.mxu0 0
    %1715 = vmatpush2.bf16.msra.mxu0 0
    %1716 = vmatprep.subr.bf16.mxu0 0
    %1717 = vmatpush2.bf16.msra.mxu0 0
    %1718 = vmatprep.subr.bf16.mxu0 0
    %1719 = vmatpush2.bf16.msra.mxu0 0
    %1720 = vmatprep.mubr.bf16.mxu0 0
    %1721 = vmatmul.mubr.bf16.gmra.mxu0 %v1616
    %v1722 = vpop.f32.mrf.mxu0
    %v1723 = vadd.f32 %v1638, %v1722
    %v1724 = vpop.f32.mrf.mxu0
    %v1725 = vpop.f32.mrf.mxu0
    %v1726 = vpop.f32.mrf.mxu0
    %1727 = vdwg.mxu0
    %1728 = vst [vmem:[%s9] sm:$0xff] %v1723
    // Predicated region
    $region46: #{classifier_forward.1} parent=1 // pred_check
      _
    $region47: #{classifier_forward.1} parent=1 // pred_check_branch
      %1730 = sbr.rel (0) target = $region49
    $region48: #{classifier_forward.1} parent=1 // pred_region
      _
    $region49: #{classifier_forward.1} parent=1 // pred_fallthru
      _
    // Predicated region
    $region50: #{classifier_forward.1} parent=1 // pred_check
      _
    $region51: #{classifier_forward.1} parent=1 // pred_check_branch
      %1732 = sbr.rel (0) target = $region53
    $region52: #{classifier_forward.1} parent=1 // pred_region
      _
    $region53: #{classifier_forward.1} parent=1 // pred_fallthru
      _
    %1733 = vsyncpa [#allocation3], 1
    %1734 = vsyncpa [#allocation5], 1

</llo_original>
